<compile_context>
chip_gen: v7x
topology: tpu7x:2x2x1
jax: 0.10.0
libtpu: 0.0.40
codegen_flags: <defaults>
</compile_context>

<pallas_src>
import functools

import jax
import jax.numpy as jnp
from jax.experimental import pallas as pl
from jax.experimental.pallas import tpu as pltpu


# Large finite negative instead of -inf: identical softmax output for partially
# masked columns (exp underflows to exactly 0) and no NaN if a column is ever
# fully masked (the torch module would give NaN in that degenerate case).
_MASK_VALUE = -1e30


# ------------------------------ kernel body ---------------------------------


def _sdpa_kernel(*refs, inv_temperature, with_attn):
    if with_attn:
        (q_ref, k_ref, v_ref, mask_ref, out_ref, attn_ref, acc_ref, qs_ref) = refs
    else:
        (q_ref, k_ref, v_ref, mask_ref, out_ref, acc_ref, qs_ref) = refs
        attn_ref = None

    kt = pl.program_id(2)

    @pl.when(kt == 0)
    def _init():
        acc_ref[...] = jnp.zeros_like(acc_ref)
        # Hoist the 1/temperature scaling of Q out of the key-tile loop; keep it
        # in Q's native dtype so the MXU sees native (e.g. bf16) operands.
        qs_ref[...] = q_ref[0] * inv_temperature

    q = qs_ref[...]        # (TH, Lq, D), already scaled by 1/temperature
    k = k_ref[0]           # (TH, TK, D)
    v = v_ref[0]           # (TH, TK, D)

    # S = Q K^T without an explicit K transpose: contract the last (lane) dims,
    # batch over the folded head axis.
    s = jax.lax.dot_general(
        q, k, dimension_numbers=(((2,), (2,)), ((0,), (0,))),
        preferred_element_type=jnp.float32)              # (TH, Lq, TK) f32

    # masked_fill(mask, -inf): use the mask tile directly (bool or integer),
    # no widening pass over the largest in-kernel tile.
    m = mask_ref[0]
    masked = m if m.dtype == jnp.bool_ else (m != 0)
    s = jnp.where(masked, _MASK_VALUE, s)

    # softmax over the *query* axis (dim=2 of [B,H,Lq,Lk]) == axis 1 here.
    # Lq is fully resident in the block, so every key tile's softmax is complete
    # and independent -- no online-softmax state needed across key tiles.
    s_max = jnp.max(s, axis=1, keepdims=True)
    e = jnp.exp(s - s_max)                               # (TH, Lq, TK)
    denom = jnp.sum(e, axis=1, keepdims=True)            # (TH, 1, TK)
    attn = e * (1.0 / denom)                             # exact normalization

    # TODO(synk): nn.Dropout is identity in eval mode; training-mode dropout
    # (pltpu.prng_seed / prng_random_bits based) intentionally omitted.

    if attn_ref is not None:
        attn_ref[0] = attn.astype(attn_ref.dtype)

    # Accumulate this key tile's A @ V contribution; cast the probabilities to
    # V's dtype so bf16 pipelines keep bf16 MXU operands (accumulation is f32).
    acc_ref[...] += jax.lax.dot_general(
        attn.astype(v.dtype), v,
        dimension_numbers=(((2,), (1,)), ((0,), (0,))),
        preferred_element_type=jnp.float32)              # (TH, Lq, D)

    # Tiny (TH, Lq, D) store each step; the HBM copy-out still only happens when
    # the output block index changes (i.e. after the last key tile).
    out_ref[0] = acc_ref[...].astype(out_ref.dtype)


# ----------------------------- tile selection --------------------------------


def _lane_pad(n):
    return ((n + 127) // 128) * 128


def _vmem_limit_bytes():
    """~75% of per-core VMEM: ~48 MiB on v7x, ~96 MiB on v5e/v6e."""
    cap = None
    try:
        cap = getattr(pltpu.get_tpu_info(), "vmem_capacity_bytes", None)
    except Exception:
        cap = None
    if not cap:
        cap = 64 * 1024 * 1024   # conservative fallback (v7x physical size)
    return int(cap) * 3 // 4


def _choose_block_k(lk, cap=256):
    """Largest divisor of Lk that is a multiple of 128 and <= cap; else Lk.

    cap=256 matches the 256x256 MXU on v6e/v7x while keeping the f32 (Lq, tk)
    score/exp temporaries modest (also fine for v5e's 128x128 MXU).
    """
    best = None
    d = 128
    while d <= min(lk, cap):
        if lk % d == 0:
            best = d
        d += 128
    return best if best is not None else lk


def _choose_block_h(h, b, lq, tk, d, itemsize, return_attn, budget_bytes):
    """Fold as many heads per grid step as fit the VMEM budget.

    Models 2x double-buffering of every input/output block, the attn output tile
    when requested, lane padding for D < 128, the f32 accumulator + scaled-Q
    scratch, and the in-kernel f32 score/exp temporaries.  Also keeps at least
    two parallel (batch, head-block) grid blocks so both TensorCores get work on
    megacore parts (v7x); on 1-core parts this never hurts when B >= 2.
    """
    d_pad, tk_pad = _lane_pad(d), _lane_pad(tk)
    per_head = (
        2 * (lq * d_pad + 2 * tk * d_pad) * itemsize       # Q + K + V blocks (x2 buf)
        + 2 * lq * tk_pad * 1                              # mask block (1 B/elem, x2)
        + 2 * lq * d_pad * itemsize                        # out block (x2 buf)
        + (2 * lq * tk_pad * itemsize if return_attn else 0)   # attn block (x2 buf)
        + lq * d_pad * (4 + itemsize)                      # f32 acc + scaled-Q scratch
        + 2 * lq * tk_pad * 4)                             # f32 score / exp temporaries
    min_parallel = min(2, b * h)
    best = 1
    for cand in range(1, h + 1):
        if h % cand:
            continue
        if cand * per_head > budget_bytes:
            continue
        if b * (h // cand) < min_parallel:
            continue
        best = cand
    return best


# --------------------------------- wrapper -----------------------------------


def scaled_dot_product_attention(Q, K, V, mask, temperature, *,
                                 block_k=None, block_h=None, return_attn=True,
                                 attn_dtype=None):
    """Q: [B,H,Lq,D]; K/V: [B,H,Lk,D]; mask: [B,H,Lq,Lk] or [B,1,Lq,Lk]."""
    B, H, Lq, D = Q.shape
    Lk = K.shape[2]
    assert K.shape == (B, H, Lk, D) and V.shape == (B, H, Lk, D)
    mask_h = mask.shape[1]
    assert mask.shape in ((B, H, Lq, Lk), (B, 1, Lq, Lk)), mask.shape

    vmem_limit = _vmem_limit_bytes()
    tk = block_k if block_k is not None else _choose_block_k(Lk)
    assert Lk % tk == 0, "block_k must divide Lk"
    th = block_h if block_h is not None else _choose_block_h(
        H, B, Lq, tk, D, Q.dtype.itemsize, return_attn, vmem_limit // 2)
    assert H % th == 0, "block_h must divide H"

    inv_temperature = float(1.0 / float(temperature))
    attn_dtype = Q.dtype if attn_dtype is None else attn_dtype
    grid = (B, H // th, Lk // tk)

    if mask_h == H:
        mask_spec = pl.BlockSpec((1, th, Lq, tk), lambda b, h, kt: (b, h, 0, kt))
    else:   # head-broadcast mask [B, 1, Lq, Lk]: H x less mask DMA
        mask_spec = pl.BlockSpec((1, 1, Lq, tk), lambda b, h, kt: (b, 0, 0, kt))

    in_specs = [
        pl.BlockSpec((1, th, Lq, D), lambda b, h, kt: (b, h, 0, 0)),    # Q
        pl.BlockSpec((1, th, tk, D), lambda b, h, kt: (b, h, kt, 0)),   # K
        pl.BlockSpec((1, th, tk, D), lambda b, h, kt: (b, h, kt, 0)),   # V
        mask_spec,                                                      # mask
    ]
    out_spec_o = pl.BlockSpec((1, th, Lq, D), lambda b, h, kt: (b, h, 0, 0))

    if return_attn:
        out_shape = (jax.ShapeDtypeStruct((B, H, Lq, D), Q.dtype),
                     jax.ShapeDtypeStruct((B, H, Lq, Lk), attn_dtype))
        out_specs = (out_spec_o,
                     pl.BlockSpec((1, th, Lq, tk), lambda b, h, kt: (b, h, 0, kt)))
    else:
        out_shape = jax.ShapeDtypeStruct((B, H, Lq, D), Q.dtype)
        out_specs = out_spec_o

    kernel = functools.partial(_sdpa_kernel, inv_temperature=inv_temperature,
                               with_attn=return_attn)

    grid_spec = pltpu.PrefetchScalarGridSpec(
        num_scalar_prefetch=0,
        grid=grid,
        in_specs=in_specs,
        out_specs=out_specs,
        scratch_shapes=[
            pltpu.VMEM((th, Lq, D), jnp.float32),   # f32 output accumulator
            pltpu.VMEM((th, Lq, D), Q.dtype),       # pre-scaled Q (hoisted 1/temp)
        ],
    )

    return pl.pallas_call(
        kernel,
        out_shape=out_shape,
        grid_spec=grid_spec,
        compiler_params=pltpu.CompilerParams(
            # batch and head-block axes parallel (megacore-shardable), key-tile
            # reduction axis last and "arbitrary".
            dimension_semantics=("parallel", "parallel", "arbitrary"),
            vmem_limit_bytes=vmem_limit,
        ),
    )(Q, K, V, mask)   # mask passed through unchanged: no extra HBM cast pass


# -------------------------------- reference ----------------------------------


def _reference(Q, K, V, mask, temperature):
    # HIGHEST precision so the reference is exact; the kernel runs the MXU at
    # its (faster) default precision.
    s = jnp.einsum("bhqd,bhkd->bhqk", Q, K,
                   precision=jax.lax.Precision.HIGHEST) / temperature
    s = jnp.where(mask, -jnp.inf, s)
    attn = jax.nn.softmax(s, axis=2)   # dim=2, as in the PyTorch module
    out = jnp.einsum("bhqk,bhkd->bhqd", attn, V,
                     precision=jax.lax.Precision.HIGHEST)
    return out, attn


if __name__ == "__main__":
    B, H, Lq, Lk, D = 2, 2, 128, 256, 32
    temperature = float(D) ** 0.5

    key = jax.random.PRNGKey(0)
    kq, kk, kv, km = jax.random.split(key, 4)
    Q = jax.random.normal(kq, (B, H, Lq, D), dtype=jnp.float32)
    K = jax.random.normal(kk, (B, H, Lk, D), dtype=jnp.float32)
    V = jax.random.normal(kv, (B, H, Lk, D), dtype=jnp.float32)
    # sparse boolean mask (True = masked); every softmax column stays partially unmasked
    mask = jax.random.uniform(km, (B, H, Lq, Lk)) > 0.8

    out_ref, attn_ref = _reference(Q, K, V, mask, temperature)

    # TPU f32 matmuls run at bf16-pass precision on the MXU by default, so the
    # tolerance covers that gap vs. the HIGHEST-precision reference.
    tol = dict(atol=2e-2, rtol=2e-2)

    # 1) multi-key-tile path (block_k=128 -> 2 key tiles; exercises the accumulator)
    out, attn = scaled_dot_product_attention(Q, K, V, mask, temperature, block_k=128)
    jax.block_until_ready((out, attn))
    assert out.shape == (B, H, Lq, D) and attn.shape == (B, H, Lq, Lk)
    assert bool(jnp.allclose(out, out_ref, **tol)), "out mismatch (multi key tile)"
    assert bool(jnp.allclose(attn, attn_ref, **tol)), "attn mismatch (multi key tile)"

    # 2) auto tile sizes + output-only variant (skips the O(L^2) attn writeback)
    out2 = scaled_dot_product_attention(Q, K, V, mask, temperature, return_attn=False)
    jax.block_until_ready(out2)
    assert bool(jnp.allclose(out2, out_ref, **tol)), "out mismatch (return_attn=False)"

    # 3) head-broadcast mask [B, 1, Lq, Lk] (mask HBM DMA shrinks by H x)
    mask_b = mask[:, :1]
    out_ref_b, _ = _reference(Q, K, V, mask_b, temperature)
    out3 = scaled_dot_product_attention(Q, K, V, mask_b, temperature,
                                        return_attn=False)
    jax.block_until_ready(out3)
    assert bool(jnp.allclose(out3, out_ref_b, **tol)), "out mismatch (broadcast mask)"

    print("KERNEL_OK")
</pallas_src>

<mosaic_0001>
module attributes {stable_mosaic.version = 11 : i64} {
  func.func @_sdpa_kernel(%arg0: i32, %arg1: i32, %arg2: i32, %arg3: memref<1x2x128x32xf32, #tpu.memory_space<vmem>>, %arg4: memref<1x2x128x32xf32, #tpu.memory_space<vmem>>, %arg5: memref<1x2x128x32xf32, #tpu.memory_space<vmem>>, %arg6: memref<1x2x128x128xi32, #tpu.memory_space<vmem>>, %arg7: memref<1x2x128x32xf32, #tpu.memory_space<vmem>>, %arg8: memref<1x2x128x128xf32, #tpu.memory_space<vmem>>, %arg9: memref<2x128x32xf32, #tpu.memory_space<vmem>>, %arg10: memref<2x128x32xf32, #tpu.memory_space<vmem>>) attributes {dimension_semantics = [#tpu.dimension_semantics<parallel>, #tpu.dimension_semantics<parallel>, #tpu.dimension_semantics<arbitrary>], iteration_bounds = array<i64: 2, 1, 2>, scalar_prefetch = 0 : i64, scratch_operands = 2 : i64, tpu.core_type = #tpu.core_type<tc>, window_params = [{transform_indices = @transform_0, window_bounds = array<i64: 1, 2, 128, 32>}, {transform_indices = @transform_1, window_bounds = array<i64: 1, 2, 128, 32>}, {transform_indices = @transform_2, window_bounds = array<i64: 1, 2, 128, 32>}, {transform_indices = @transform_3, window_bounds = array<i64: 1, 2, 128, 128>}, {transform_indices = @transform_4, window_bounds = array<i64: 1, 2, 128, 32>}, {transform_indices = @transform_5, window_bounds = array<i64: 1, 2, 128, 128>}]} {
    %c0_i32 = arith.constant 0 : i32
    %0 = arith.cmpi eq, %arg2, %c0_i32 : i32
    %1 = arith.extui %0 : i1 to i32
    %c0_i32_0 = arith.constant 0 : i32
    %2 = arith.cmpi ne, %1, %c0_i32_0 : i32
    scf.if %2 {
      %cst_38 = arith.constant 0.000000e+00 : f32
      %36 = vector.broadcast %cst_38 : f32 to vector<2x128x32xf32>
      %c0_39 = arith.constant 0 : index
      %c0_40 = arith.constant 0 : index
      %c0_41 = arith.constant 0 : index
      %37 = vector.load %arg9[%c0_39, %c0_40, %c0_41] : memref<2x128x32xf32, #tpu.memory_space<vmem>>, vector<2x128x32xf32>
      tpu.vector_store %arg9[%c0_39, %c0_40, %c0_41], %36 {strides = array<i32>} : memref<2x128x32xf32, #tpu.memory_space<vmem>>, vector<2x128x32xf32>,
      %c0_42 = arith.constant 0 : index
      %c0_43 = arith.constant 0 : index
      %c0_44 = arith.constant 0 : index
      %c0_45 = arith.constant 0 : index
      %38 = vector.load %arg3[%c0_42, %c0_43, %c0_44, %c0_45] : memref<1x2x128x32xf32, #tpu.memory_space<vmem>>, vector<1x2x128x32xf32>
      %39 = vector.shape_cast %38 : vector<1x2x128x32xf32> to vector<2x128x32xf32>
      %cst_46 = arith.constant 0.176776692 : f32
      %40 = vector.broadcast %cst_46 : f32 to vector<2x128x32xf32>
      %41 = arith.mulf %39, %40 : vector<2x128x32xf32>
      %c0_47 = arith.constant 0 : index
      %c0_48 = arith.constant 0 : index
      %c0_49 = arith.constant 0 : index
      %42 = vector.load %arg10[%c0_47, %c0_48, %c0_49] : memref<2x128x32xf32, #tpu.memory_space<vmem>>, vector<2x128x32xf32>
      tpu.vector_store %arg10[%c0_47, %c0_48, %c0_49], %41 {strides = array<i32>} : memref<2x128x32xf32, #tpu.memory_space<vmem>>, vector<2x128x32xf32>,
    } else {
    }
    %c0 = arith.constant 0 : index
    %c0_1 = arith.constant 0 : index
    %c0_2 = arith.constant 0 : index
    %3 = vector.load %arg10[%c0, %c0_1, %c0_2] : memref<2x128x32xf32, #tpu.memory_space<vmem>>, vector<2x128x32xf32>
    %c0_3 = arith.constant 0 : index
    %c0_4 = arith.constant 0 : index
    %c0_5 = arith.constant 0 : index
    %c0_6 = arith.constant 0 : index
    %4 = vector.load %arg4[%c0_3, %c0_4, %c0_5, %c0_6] : memref<1x2x128x32xf32, #tpu.memory_space<vmem>>, vector<1x2x128x32xf32>
    %5 = vector.shape_cast %4 : vector<1x2x128x32xf32> to vector<2x128x32xf32>
    %c0_7 = arith.constant 0 : index
    %c0_8 = arith.constant 0 : index
    %c0_9 = arith.constant 0 : index
    %c0_10 = arith.constant 0 : index
    %6 = vector.load %arg5[%c0_7, %c0_8, %c0_9, %c0_10] : memref<1x2x128x32xf32, #tpu.memory_space<vmem>>, vector<1x2x128x32xf32>
    %7 = vector.shape_cast %6 : vector<1x2x128x32xf32> to vector<2x128x32xf32>
    %cst = arith.constant dense<0.000000e+00> : vector<2x128x128xf32>
    %8 = tpu.matmul %3, %5, %cst {dimension_numbers = #tpu.dot_dimension_numbers<[2], [2], [1], [1], [0, 0, 0, 1, 1, 1], [0], [0]>} : vector<2x128x32xf32>, vector<2x128x32xf32>, vector<2x128x128xf32> -> vector<2x128x128xf32>
    %c0_11 = arith.constant 0 : index
    %c0_12 = arith.constant 0 : index
    %c0_13 = arith.constant 0 : index
    %c0_14 = arith.constant 0 : index
    %9 = vector.load %arg6[%c0_11, %c0_12, %c0_13, %c0_14] : memref<1x2x128x128xi32, #tpu.memory_space<vmem>>, vector<1x2x128x128xi32>
    %10 = vector.shape_cast %9 : vector<1x2x128x128xi32> to vector<2x128x128xi32>
    %cst_15 = arith.constant dense<0> : vector<2x128x128xi32>
    %11 = arith.cmpi ne, %10, %cst_15 : vector<2x128x128xi32>
    %cst_16 = arith.constant -1.000000e+30 : f32
    %12 = vector.broadcast %cst_16 : f32 to vector<2x128x128xf32>
    %13 = arith.select %11, %12, %8 : vector<2x128x128xi1>, vector<2x128x128xf32>
    %cst_17 = arith.constant dense<0xFF800000> : vector<2x128xf32>
    %14 = vector.multi_reduction <maximumf>, %13, %cst_17 [1] : vector<2x128x128xf32> to vector<2x128xf32>
    %15 = vector.shape_cast %14 : vector<2x128xf32> to vector<2x1x128xf32>
    %16 = vector.broadcast %15 : vector<2x1x128xf32> to vector<2x128x128xf32>
    %17 = arith.subf %13, %16 : vector<2x128x128xf32>
    %18 = math.exp %17 : vector<2x128x128xf32>
    %cst_18 = arith.constant dense<0.000000e+00> : vector<2x128xf32>
    %19 = vector.multi_reduction <add>, %18, %cst_18 [1] : vector<2x128x128xf32> to vector<2x128xf32>
    %20 = vector.shape_cast %19 : vector<2x128xf32> to vector<2x1x128xf32>
    %cst_19 = arith.constant 1.000000e+00 : f32
    %21 = vector.broadcast %cst_19 : f32 to vector<2x1x128xf32>
    %22 = arith.divf %21, %20 : vector<2x1x128xf32>
    %23 = vector.broadcast %22 : vector<2x1x128xf32> to vector<2x128x128xf32>
    %24 = arith.mulf %18, %23 : vector<2x128x128xf32>
    %c0_20 = arith.constant 0 : index
    %c0_21 = arith.constant 0 : index
    %c0_22 = arith.constant 0 : index
    %c0_23 = arith.constant 0 : index
    %25 = vector.load %arg8[%c0_20, %c0_21, %c0_22, %c0_23] : memref<1x2x128x128xf32, #tpu.memory_space<vmem>>, vector<1x2x128x128xf32>
    %26 = vector.shape_cast %25 : vector<1x2x128x128xf32> to vector<2x128x128xf32>
    %27 = vector.shape_cast %24 : vector<2x128x128xf32> to vector<1x2x128x128xf32>
    tpu.vector_store %arg8[%c0_20, %c0_21, %c0_22, %c0_23], %27 {strides = array<i32>} : memref<1x2x128x128xf32, #tpu.memory_space<vmem>>, vector<1x2x128x128xf32>,
    %c0_24 = arith.constant 0 : index
    %c0_25 = arith.constant 0 : index
    %c0_26 = arith.constant 0 : index
    %28 = vector.load %arg9[%c0_24, %c0_25, %c0_26] : memref<2x128x32xf32, #tpu.memory_space<vmem>>, vector<2x128x32xf32>
    %cst_27 = arith.constant dense<0.000000e+00> : vector<2x128x32xf32>
    %29 = tpu.matmul %24, %7, %cst_27 {dimension_numbers = #tpu.dot_dimension_numbers<[2], [1], [1], [2], [0, 0, 0, 1, 1, 2], [0], [0]>} : vector<2x128x128xf32>, vector<2x128x32xf32>, vector<2x128x32xf32> -> vector<2x128x32xf32>
    %30 = arith.addf %28, %29 : vector<2x128x32xf32>
    %c0_28 = arith.constant 0 : index
    %c0_29 = arith.constant 0 : index
    %c0_30 = arith.constant 0 : index
    %31 = vector.load %arg9[%c0_28, %c0_29, %c0_30] : memref<2x128x32xf32, #tpu.memory_space<vmem>>, vector<2x128x32xf32>
    tpu.vector_store %arg9[%c0_28, %c0_29, %c0_30], %30 {strides = array<i32>} : memref<2x128x32xf32, #tpu.memory_space<vmem>>, vector<2x128x32xf32>,
    %c0_31 = arith.constant 0 : index
    %c0_32 = arith.constant 0 : index
    %c0_33 = arith.constant 0 : index
    %32 = vector.load %arg9[%c0_31, %c0_32, %c0_33] : memref<2x128x32xf32, #tpu.memory_space<vmem>>, vector<2x128x32xf32>
    %c0_34 = arith.constant 0 : index
    %c0_35 = arith.constant 0 : index
    %c0_36 = arith.constant 0 : index
    %c0_37 = arith.constant 0 : index
    %33 = vector.load %arg7[%c0_34, %c0_35, %c0_36, %c0_37] : memref<1x2x128x32xf32, #tpu.memory_space<vmem>>, vector<1x2x128x32xf32>
    %34 = vector.shape_cast %33 : vector<1x2x128x32xf32> to vector<2x128x32xf32>
    %35 = vector.shape_cast %32 : vector<2x128x32xf32> to vector<1x2x128x32xf32>
    tpu.vector_store %arg7[%c0_34, %c0_35, %c0_36, %c0_37], %35 {strides = array<i32>} : memref<1x2x128x32xf32, #tpu.memory_space<vmem>>, vector<1x2x128x32xf32>,
    return
  }
  func.func @transform_0(%arg0: i32, %arg1: i32, %arg2: i32) -> (i32, i32, i32, i32) {
    %c0_i32 = arith.constant 0 : i32
    %c0_i32_0 = arith.constant 0 : i32
    %c0_i32_1 = arith.constant 0 : i32
    return %arg0, %arg1, %c0_i32, %c0_i32_0 : i32, i32, i32, i32
  }
  func.func @transform_1(%arg0: i32, %arg1: i32, %arg2: i32) -> (i32, i32, i32, i32) {
    %c0_i32 = arith.constant 0 : i32
    %c0_i32_0 = arith.constant 0 : i32
    return %arg0, %arg1, %arg2, %c0_i32 : i32, i32, i32, i32
  }
  func.func @transform_2(%arg0: i32, %arg1: i32, %arg2: i32) -> (i32, i32, i32, i32) {
    %c0_i32 = arith.constant 0 : i32
    %c0_i32_0 = arith.constant 0 : i32
    return %arg0, %arg1, %arg2, %c0_i32 : i32, i32, i32, i32
  }
  func.func @transform_3(%arg0: i32, %arg1: i32, %arg2: i32) -> (i32, i32, i32, i32) {
    %c0_i32 = arith.constant 0 : i32
    %c0_i32_0 = arith.constant 0 : i32
    return %arg0, %arg1, %c0_i32, %arg2 : i32, i32, i32, i32
  }
  func.func @transform_4(%arg0: i32, %arg1: i32, %arg2: i32) -> (i32, i32, i32, i32) {
    %c0_i32 = arith.constant 0 : i32
    %c0_i32_0 = arith.constant 0 : i32
    %c0_i32_1 = arith.constant 0 : i32
    return %arg0, %arg1, %c0_i32, %c0_i32_0 : i32, i32, i32, i32
  }
  func.func @transform_5(%arg0: i32, %arg1: i32, %arg2: i32) -> (i32, i32, i32, i32) {
    %c0_i32 = arith.constant 0 : i32
    %c0_i32_0 = arith.constant 0 : i32
    return %arg0, %arg1, %c0_i32, %arg2 : i32, i32, i32, i32
  }
}

</mosaic_0001>

<llo_original>
// kernel: tpu_custom_call.1
$region0: #{tpu_custom_call.1}
  #allocation0 [shape = 'u32[]', space=smem, size = 0x4, offset = 0x4, fixed_abs, tag = 'smem constant byte address 0x4 - core index']
  #allocation1 [shape = 'u32[144,128]{1,0:T(1,128)}', space=vmem, size = 0x12000, scoped, tag = 'internal scratch']
  #allocation2 [shape = 'f32[2,128,32]{2,1,0:T(8,128)}', space=vmem, size = 0x20000, scoped, tag = 'scratch operand']
  #allocation3 [shape = 'f32[2,128,32]{2,1,0:T(8,128)}', space=vmem, size = 0x20000, scoped, tag = 'scratch operand']
  %s0 = inlined_call_operand.vmem [shape: f32[2,2,128,32], index: 0, kind: input, shape index: {}]
  %s1 = inlined_call_operand.vmem [shape: f32[2,2,256,32], index: 1, kind: input, shape index: {}]
  %s2 = inlined_call_operand.vmem [shape: f32[2,2,256,32], index: 2, kind: input, shape index: {}]
  %s3 = inlined_call_operand.vmem [shape: s32[2,2,128,256], index: 3, kind: input, shape index: {}]
  %s4 = inlined_call_operand.vmem [shape: f32[2,2,128,32], index: 4, kind: output, shape index: {0}]
  %s5 = inlined_call_operand.hbm [shape: f32[2,2,128,256], index: 5, kind: output, shape index: {1}]
  %6 = xla_tuple %s4, %s5
  %s7 = sld [smem:[#allocation0]]
  $region175: #{tpu_custom_call.1} parent=0
    _
  %s9 = ssub.s32 1, %s7
  %s10 = scalar_select 0, %s9, %s7
  $region1: #{tpu_custom_call.1} parent=0
    #allocation4 [shape = 'u8[262144]{0}', space=vmem, size = 0x40000, scoped, tag = 'input window, operand 1']
    #allocation5 [shape = 'u8[262144]{0}', space=vmem, size = 0x40000, scoped, tag = 'input window, operand 2']
    #allocation6 [shape = 'u8[262144]{0}', space=vmem, size = 0x40000, scoped, tag = 'input window, operand 3']
    #allocation7 [shape = 'u8[262144]{0}', space=vmem, size = 0x40000, scoped, tag = 'output window, operand 1']
    #allocation8 [shape = 's32[2]{0}', space=sflag, size = 0x8, scoped, tag = 'scoped memory for tpu_custom_call.1']
    %11 = vsyncpa [#allocation8], 0
    %s12 = scalar_lea.sflag [#allocation8], 1
    %13 = vsyncpa %s12, 0
    loop: start=0, step=1, limit=6
    $region2: #{tpu_custom_call.1} parent=1 // loop_pre_header
      _
    $region3: #{tpu_custom_call.1} parent=1 // loop_header
      %s15 = sphi 0, %s19
      %p16 = scmp.ge.s32.totalorder %s15, 6
      %s22 = sphi 0, %s41
      %s23 = sphi 0, %s37
      %s24 = sphi 0, %s33
      %s25 = sphi 0, %s22
      %s26 = sphi 0, %s23
      %s27 = sphi 0, %s24
      %s28 = sphi 0, %s25
      %s29 = sphi 0, %s26
      %s30 = sphi 0, %s27
      %s46 = sphi 0, %s48
      %s49 = sphi 0, %s46
      %s50 = sphi 0, %s49
      %s66 = sphi 0, %s50
      %s76 = sphi 0, %s78
      %s79 = sphi 0, %s76
      %s80 = sphi 0, %s79
      %s96 = sphi 0, %s80
      %s106 = sphi 0, %s108
      %s109 = sphi 0, %s106
      %s110 = sphi 0, %s109
      %s126 = sphi 0, %s110
      %s136 = sphi 0, %s138
      %s139 = sphi 0, %s136
      %s140 = sphi 0, %s139
      %s156 = sphi 0, %s140
      %s164 = sphi 0, %s166
      %s167 = sphi 0, %s164
      %s168 = sphi 0, %s167
      %s184 = sphi 0, %s168
      %s194 = sphi 0, %s196
      %s197 = sphi 0, %s194
      %s198 = sphi 0, %s197
      %s214 = sphi 0, %s198
    $region4: #{tpu_custom_call.1} parent=1 // loop_header_branch
      %18 = sbr.rel (%p16) target = $region8
    $region5: #{tpu_custom_call.1} parent=1 // loop_body
      %s20 = ssub.s32 %s15, 1
      %s21 = ssub.s32 %s15, 2
      %s31 = sadd.s32 1, %s24
      %p32 = scmp.ge.s32.totalorder %s31, 2
      %s33 = scalar_select %p32, 0, %s31
      %s34 = sadd.s32 1, %s23
      %s35 = scalar_select %p32, %s34, %s23
      %p36 = scmp.ge.s32.totalorder %s35, 1
      %s37 = scalar_select %p36, 0, %s35
      %s38 = sadd.s32 1, %s22
      %s39 = scalar_select %p36, %s38, %s22
      %p40 = scmp.ge.s32.totalorder %s39, 2
      %s41 = scalar_select %p40, 0, %s39
      %s42 = ssub.s32 %s22, %s41
      %s43 = ssub.s32 %s23, %s37
      %s44 = sor.u32 %s42, %s43
      %p45 = scmp.eq.s32.totalorder %s44, 0
      %s47 = sadd.s32 %s46, 1
      %s48 = scalar_select %p45, %s46, %s47
      %p51 = pneg %p45
      %p52 = scmp.eq.s32.totalorder %s15, 3
      %p53 = por %p51, %p52
      %p54 = scmp.ne.s32.totalorder %s46, %s49
      %p55 = scmp.eq.s32.totalorder %s15, 0
      %p56 = por %p54, %p55
      %p57 = scmp.ne.s32.totalorder %s46, %s49
      %p58 = scmp.eq.s32.totalorder %s20, 3
      %p59 = por %p57, %p58
      %p60 = scmp.ne.s32.totalorder %s49, %s50
      %p61 = scmp.eq.s32.totalorder %s20, 0
      %p62 = por %p60, %p61
      %p63 = scmp.ne.s32.totalorder %s49, %s50
      %p64 = scmp.eq.s32.totalorder %s21, 3
      %p65 = por %p63, %p64
      %p67 = scmp.ne.s32.totalorder %s50, %s66
      %p68 = scmp.eq.s32.totalorder %s21, 0
      %p69 = por %p67, %p68
      %s70 = ssub.s32 %s22, %s41
      %s71 = ssub.s32 %s23, %s37
      %s72 = sor.u32 %s70, %s71
      %s73 = ssub.s32 %s24, %s33
      %s74 = sor.u32 %s72, %s73
      %p75 = scmp.eq.s32.totalorder %s74, 0
      %s77 = sadd.s32 %s76, 1
      %s78 = scalar_select %p75, %s76, %s77
      %p81 = pneg %p75
      %p82 = scmp.eq.s32.totalorder %s15, 3
      %p83 = por %p81, %p82
      %p84 = scmp.ne.s32.totalorder %s76, %s79
      %p85 = scmp.eq.s32.totalorder %s15, 0
      %p86 = por %p84, %p85
      %p87 = scmp.ne.s32.totalorder %s76, %s79
      %p88 = scmp.eq.s32.totalorder %s20, 3
      %p89 = por %p87, %p88
      %p90 = scmp.ne.s32.totalorder %s79, %s80
      %p91 = scmp.eq.s32.totalorder %s20, 0
      %p92 = por %p90, %p91
      %p93 = scmp.ne.s32.totalorder %s79, %s80
      %p94 = scmp.eq.s32.totalorder %s21, 3
      %p95 = por %p93, %p94
      %p97 = scmp.ne.s32.totalorder %s80, %s96
      %p98 = scmp.eq.s32.totalorder %s21, 0
      %p99 = por %p97, %p98
      %s100 = ssub.s32 %s22, %s41
      %s101 = ssub.s32 %s23, %s37
      %s102 = sor.u32 %s100, %s101
      %s103 = ssub.s32 %s24, %s33
      %s104 = sor.u32 %s102, %s103
      %p105 = scmp.eq.s32.totalorder %s104, 0
      %s107 = sadd.s32 %s106, 1
      %s108 = scalar_select %p105, %s106, %s107
      %p111 = pneg %p105
      %p112 = scmp.eq.s32.totalorder %s15, 3
      %p113 = por %p111, %p112
      %p114 = scmp.ne.s32.totalorder %s106, %s109
      %p115 = scmp.eq.s32.totalorder %s15, 0
      %p116 = por %p114, %p115
      %p117 = scmp.ne.s32.totalorder %s106, %s109
      %p118 = scmp.eq.s32.totalorder %s20, 3
      %p119 = por %p117, %p118
      %p120 = scmp.ne.s32.totalorder %s109, %s110
      %p121 = scmp.eq.s32.totalorder %s20, 0
      %p122 = por %p120, %p121
      %p123 = scmp.ne.s32.totalorder %s109, %s110
      %p124 = scmp.eq.s32.totalorder %s21, 3
      %p125 = por %p123, %p124
      %p127 = scmp.ne.s32.totalorder %s110, %s126
      %p128 = scmp.eq.s32.totalorder %s21, 0
      %p129 = por %p127, %p128
      %s130 = ssub.s32 %s22, %s41
      %s131 = ssub.s32 %s23, %s37
      %s132 = sor.u32 %s130, %s131
      %s133 = ssub.s32 %s24, %s33
      %s134 = sor.u32 %s132, %s133
      %p135 = scmp.eq.s32.totalorder %s134, 0
      %s137 = sadd.s32 %s136, 1
      %s138 = scalar_select %p135, %s136, %s137
      %p141 = pneg %p135
      %p142 = scmp.eq.s32.totalorder %s15, 3
      %p143 = por %p141, %p142
      %p144 = scmp.ne.s32.totalorder %s136, %s139
      %p145 = scmp.eq.s32.totalorder %s15, 0
      %p146 = por %p144, %p145
      %p147 = scmp.ne.s32.totalorder %s136, %s139
      %p148 = scmp.eq.s32.totalorder %s20, 3
      %p149 = por %p147, %p148
      %p150 = scmp.ne.s32.totalorder %s139, %s140
      %p151 = scmp.eq.s32.totalorder %s20, 0
      %p152 = por %p150, %p151
      %p153 = scmp.ne.s32.totalorder %s139, %s140
      %p154 = scmp.eq.s32.totalorder %s21, 3
      %p155 = por %p153, %p154
      %p157 = scmp.ne.s32.totalorder %s140, %s156
      %p158 = scmp.eq.s32.totalorder %s21, 0
      %p159 = por %p157, %p158
      %s160 = ssub.s32 %s22, %s41
      %s161 = ssub.s32 %s23, %s37
      %s162 = sor.u32 %s160, %s161
      %p163 = scmp.eq.s32.totalorder %s162, 0
      %s165 = sadd.s32 %s164, 1
      %s166 = scalar_select %p163, %s164, %s165
      %p169 = pneg %p163
      %p170 = scmp.eq.s32.totalorder %s15, 3
      %p171 = por %p169, %p170
      %p172 = scmp.ne.s32.totalorder %s164, %s167
      %p173 = scmp.eq.s32.totalorder %s15, 0
      %p174 = por %p172, %p173
      %p175 = scmp.ne.s32.totalorder %s164, %s167
      %p176 = scmp.eq.s32.totalorder %s20, 3
      %p177 = por %p175, %p176
      %p178 = scmp.ne.s32.totalorder %s167, %s168
      %p179 = scmp.eq.s32.totalorder %s20, 0
      %p180 = por %p178, %p179
      %p181 = scmp.ne.s32.totalorder %s167, %s168
      %p182 = scmp.eq.s32.totalorder %s21, 3
      %p183 = por %p181, %p182
      %p185 = scmp.ne.s32.totalorder %s168, %s184
      %p186 = scmp.eq.s32.totalorder %s21, 0
      %p187 = por %p185, %p186
      %s188 = ssub.s32 %s22, %s41
      %s189 = ssub.s32 %s23, %s37
      %s190 = sor.u32 %s188, %s189
      %s191 = ssub.s32 %s24, %s33
      %s192 = sor.u32 %s190, %s191
      %p193 = scmp.eq.s32.totalorder %s192, 0
      %s195 = sadd.s32 %s194, 1
      %s196 = scalar_select %p193, %s194, %s195
      %p199 = pneg %p193
      %p200 = scmp.eq.s32.totalorder %s15, 3
      %p201 = por %p199, %p200
      %p202 = scmp.ne.s32.totalorder %s194, %s197
      %p203 = scmp.eq.s32.totalorder %s15, 0
      %p204 = por %p202, %p203
      %p205 = scmp.ne.s32.totalorder %s194, %s197
      %p206 = scmp.eq.s32.totalorder %s20, 3
      %p207 = por %p205, %p206
      %p208 = scmp.ne.s32.totalorder %s197, %s198
      %p209 = scmp.eq.s32.totalorder %s20, 0
      %p210 = por %p208, %p209
      %p211 = scmp.ne.s32.totalorder %s197, %s198
      %p212 = scmp.eq.s32.totalorder %s21, 3
      %p213 = por %p211, %p212
      %p215 = scmp.ne.s32.totalorder %s198, %s214
      %p216 = scmp.eq.s32.totalorder %s21, 0
      %p217 = por %p215, %p216
      %p218 = scmp.le.s32.totalorder 1, %s15
      %p219 = scmp.lt.s32.totalorder %s15, 5
      %p220 = pnand %p218, %p219
      %p221 = pneg %p220
      // Predicated region
      $region9: #{tpu_custom_call.1} parent=5 // pred_check
        _
      $region10: #{tpu_custom_call.1} parent=5 // pred_check_branch
        %223 = sbr.rel (%p220) target = $region12
      $region11: #{tpu_custom_call.1} parent=5 // pred_region
        %s224 = ssub.s32 %s15, 1
      $region12: #{tpu_custom_call.1} parent=5 // pred_fallthru
        _
      %p225 = scmp.lt.s32.totalorder %s15, 4
      // Predicated region
      $region13: #{tpu_custom_call.1} parent=5 // pred_check
        %p226 = pneg %p225
      $region14: #{tpu_custom_call.1} parent=5 // pred_check_branch
        %228 = sbr.rel (%p226) target = $region16
      $region15: #{tpu_custom_call.1} parent=5 // pred_region
        // Predicated region
        $region17: #{tpu_custom_call.1} parent=15 // pred_check
          %p229 = pneg %p56
        $region18: #{tpu_custom_call.1} parent=15 // pred_check_branch
          %231 = sbr.rel (%p229) target = $region20
        $region19: #{tpu_custom_call.1} parent=15 // pred_region
          %s232 = smul.u32 2, %s23
          %p233 = scmp.lt.s32.totalorder %s22, 1
          %s234 = scalar_select %p233, %s22, 1
          %p235 = scmp.lt.s32.totalorder %s232, 1
          %s236 = scalar_select %p235, %s232, 1
          %s237 = smul.addr %s236, 16
          %s238 = smul.addr %s234, 32
          %s239 = sadd.s32 %s237, %s238
          %s240 = smul.addr %s239, 8
          %s241 = scalar_lea.vmem %s0, %s240
          %s242 = smul.u32 2, %s23
        $region20: #{tpu_custom_call.1} parent=15 // pred_fallthru
          _
        // Predicated region
        $region21: #{tpu_custom_call.1} parent=15 // pred_check
          %p243 = pneg %p86
        $region22: #{tpu_custom_call.1} parent=15 // pred_check_branch
          %245 = sbr.rel (%p243) target = $region24
        $region23: #{tpu_custom_call.1} parent=15 // pred_region
          %s246 = sand.u32 %s76, 1
          %s247 = sand.u32 %s76, 1
          %s248 = smul.addr %s247, 256
          %s249 = scalar_lea.vmem [#allocation4], %s248
          %s250 = smul.u32 2, %s23
          %s251 = smul.u32 16, %s24
          %s252 = smul.addr %s250, 32
          %s253 = sadd.s32 %s251, %s252
          %s254 = smul.addr %s22, 64
          %s255 = sadd.s32 %s253, %s254
          %s256 = smul.addr %s255, 8
          %s257 = scalar_lea.vmem %s1, %s256
          // Predicated region
          $region25: #{tpu_custom_call.1} parent=23 // pred_check
            _
          $region26: #{tpu_custom_call.1} parent=23 // pred_check_branch
            %259 = sbr.rel (0) target = $region28
          $region27: #{tpu_custom_call.1} parent=23 // pred_region
            // Predicated region
            $region29: #{tpu_custom_call.1} parent=27 // pred_check
              _
            $region30: #{tpu_custom_call.1} parent=27 // pred_check_branch
              %261 = sbr.rel (0) target = $region32
            $region31: #{tpu_custom_call.1} parent=27 // pred_region
              // Predicated region
              $region44: #{tpu_custom_call.1} parent=31 // pred_check
                _
              $region45: #{tpu_custom_call.1} parent=31 // pred_check_branch
                %338 = sbr.rel (0) target = $region47
              $region46: #{tpu_custom_call.1} parent=31 // pred_region
                loop: start=0, step=1, limit=1
                $region48: #{tpu_custom_call.1} parent=46 // loop_pre_header
                  _
                $region49: #{tpu_custom_call.1} parent=46 // loop_header
                  %s340 = sphi 0, %s344
                  %p341 = scmp.ge.s32.totalorder %s340, 1
                  %s345 = sphi %s257, %s257
                  %s346 = sphi %s249, %s249
                $region50: #{tpu_custom_call.1} parent=46 // loop_header_branch
                  %343 = sbr.rel (%p341) target = $region54
                $region51: #{tpu_custom_call.1} parent=46 // loop_body
                  %v347 = vld [vmem:[%s345] sm:$0xff]
                  %348 = vst [vmem:[%s346] sm:$0xff] %v347
                  %v349 = vld [vmem:[%s345 + $0x8] sm:$0xff]
                  %350 = vst [vmem:[%s346 + $0x8] sm:$0xff] %v349
                  %v351 = vld [vmem:[%s345 + $0x10] sm:$0xff]
                  %352 = vst [vmem:[%s346 + $0x10] sm:$0xff] %v351
                  %v353 = vld [vmem:[%s345 + $0x18] sm:$0xff]
                  %354 = vst [vmem:[%s346 + $0x18] sm:$0xff] %v353
                  %v355 = vld [vmem:[%s345 + $0x20] sm:$0xff]
                  %356 = vst [vmem:[%s346 + $0x20] sm:$0xff] %v355
                  %v357 = vld [vmem:[%s345 + $0x28] sm:$0xff]
                  %358 = vst [vmem:[%s346 + $0x28] sm:$0xff] %v357
                  %v359 = vld [vmem:[%s345 + $0x30] sm:$0xff]
                  %360 = vst [vmem:[%s346 + $0x30] sm:$0xff] %v359
                  %v361 = vld [vmem:[%s345 + $0x38] sm:$0xff]
                  %362 = vst [vmem:[%s346 + $0x38] sm:$0xff] %v361
                  %v363 = vld [vmem:[%s345 + $0x40] sm:$0xff]
                  %364 = vst [vmem:[%s346 + $0x40] sm:$0xff] %v363
                  %v365 = vld [vmem:[%s345 + $0x48] sm:$0xff]
                  %366 = vst [vmem:[%s346 + $0x48] sm:$0xff] %v365
                  %v367 = vld [vmem:[%s345 + $0x50] sm:$0xff]
                  %368 = vst [vmem:[%s346 + $0x50] sm:$0xff] %v367
                  %v369 = vld [vmem:[%s345 + $0x58] sm:$0xff]
                  %370 = vst [vmem:[%s346 + $0x58] sm:$0xff] %v369
                  %v371 = vld [vmem:[%s345 + $0x60] sm:$0xff]
                  %372 = vst [vmem:[%s346 + $0x60] sm:$0xff] %v371
                  %v373 = vld [vmem:[%s345 + $0x68] sm:$0xff]
                  %374 = vst [vmem:[%s346 + $0x68] sm:$0xff] %v373
                  %v375 = vld [vmem:[%s345 + $0x70] sm:$0xff]
                  %376 = vst [vmem:[%s346 + $0x70] sm:$0xff] %v375
                  %v377 = vld [vmem:[%s345 + $0x78] sm:$0xff]
                  %378 = vst [vmem:[%s346 + $0x78] sm:$0xff] %v377
                  %v379 = vld [vmem:[%s345 + $0x100] sm:$0xff]
                  %380 = vst [vmem:[%s346 + $0x80] sm:$0xff] %v379
                  %v381 = vld [vmem:[%s345 + $0x108] sm:$0xff]
                  %382 = vst [vmem:[%s346 + $0x88] sm:$0xff] %v381
                  %v383 = vld [vmem:[%s345 + $0x110] sm:$0xff]
                  %384 = vst [vmem:[%s346 + $0x90] sm:$0xff] %v383
                  %v385 = vld [vmem:[%s345 + $0x118] sm:$0xff]
                  %386 = vst [vmem:[%s346 + $0x98] sm:$0xff] %v385
                  %v387 = vld [vmem:[%s345 + $0x120] sm:$0xff]
                  %388 = vst [vmem:[%s346 + $0xa0] sm:$0xff] %v387
                  %v389 = vld [vmem:[%s345 + $0x128] sm:$0xff]
                  %390 = vst [vmem:[%s346 + $0xa8] sm:$0xff] %v389
                  %v391 = vld [vmem:[%s345 + $0x130] sm:$0xff]
                  %392 = vst [vmem:[%s346 + $0xb0] sm:$0xff] %v391
                  %v393 = vld [vmem:[%s345 + $0x138] sm:$0xff]
                  %394 = vst [vmem:[%s346 + $0xb8] sm:$0xff] %v393
                  %v395 = vld [vmem:[%s345 + $0x140] sm:$0xff]
                  %396 = vst [vmem:[%s346 + $0xc0] sm:$0xff] %v395
                  %v397 = vld [vmem:[%s345 + $0x148] sm:$0xff]
                  %398 = vst [vmem:[%s346 + $0xc8] sm:$0xff] %v397
                  %v399 = vld [vmem:[%s345 + $0x150] sm:$0xff]
                  %400 = vst [vmem:[%s346 + $0xd0] sm:$0xff] %v399
                  %v401 = vld [vmem:[%s345 + $0x158] sm:$0xff]
                  %402 = vst [vmem:[%s346 + $0xd8] sm:$0xff] %v401
                  %v403 = vld [vmem:[%s345 + $0x160] sm:$0xff]
                  %404 = vst [vmem:[%s346 + $0xe0] sm:$0xff] %v403
                  %v405 = vld [vmem:[%s345 + $0x168] sm:$0xff]
                  %406 = vst [vmem:[%s346 + $0xe8] sm:$0xff] %v405
                  %v407 = vld [vmem:[%s345 + $0x170] sm:$0xff]
                  %408 = vst [vmem:[%s346 + $0xf0] sm:$0xff] %v407
                  %v409 = vld [vmem:[%s345 + $0x178] sm:$0xff]
                  %410 = vst [vmem:[%s346 + $0xf8] sm:$0xff] %v409
                $region52: #{tpu_custom_call.1} parent=46 // loop_footer
                  %s344 = sadd.s32 1, %s340
                $region53: #{tpu_custom_call.1} parent=46 // loop_footer_branch
                  %339 = sbr.rel target = $region49
                $region54: #{tpu_custom_call.1} parent=46 // loop_exit
                  _
              $region47: #{tpu_custom_call.1} parent=31 // pred_fallthru
                _
              // Predicated region
              $region55: #{tpu_custom_call.1} parent=31 // pred_check
                _
              $region56: #{tpu_custom_call.1} parent=31 // pred_check_branch
                %412 = sbr.rel target = $region58
              $region57: #{tpu_custom_call.1} parent=31 // pred_region
                _
              $region58: #{tpu_custom_call.1} parent=31 // pred_fallthru
                _
            $region32: #{tpu_custom_call.1} parent=27 // pred_fallthru
              _
            // Predicated region
            $region33: #{tpu_custom_call.1} parent=27 // pred_check
              _
            $region34: #{tpu_custom_call.1} parent=27 // pred_check_branch
              %263 = sbr.rel target = $region36
            $region35: #{tpu_custom_call.1} parent=27 // pred_region
              loop: start=0, step=1, limit=1
              $region37: #{tpu_custom_call.1} parent=35 // loop_pre_header
                _
              $region38: #{tpu_custom_call.1} parent=35 // loop_header
                %s266 = sphi 0, %s270
                %p267 = scmp.ge.s32.totalorder %s266, 1
                %s271 = sphi %s257, %s257
                %s272 = sphi %s249, %s249
              $region39: #{tpu_custom_call.1} parent=35 // loop_header_branch
                %269 = sbr.rel (%p267) target = $region43
              $region40: #{tpu_custom_call.1} parent=35 // loop_body
                %v273 = vld [vmem:[%s271] sm:$0xff]
                %274 = vst [vmem:[%s272] sm:$0xff] %v273
                %v275 = vld [vmem:[%s271 + $0x8] sm:$0xff]
                %276 = vst [vmem:[%s272 + $0x8] sm:$0xff] %v275
                %v277 = vld [vmem:[%s271 + $0x10] sm:$0xff]
                %278 = vst [vmem:[%s272 + $0x10] sm:$0xff] %v277
                %v279 = vld [vmem:[%s271 + $0x18] sm:$0xff]
                %280 = vst [vmem:[%s272 + $0x18] sm:$0xff] %v279
                %v281 = vld [vmem:[%s271 + $0x20] sm:$0xff]
                %282 = vst [vmem:[%s272 + $0x20] sm:$0xff] %v281
                %v283 = vld [vmem:[%s271 + $0x28] sm:$0xff]
                %284 = vst [vmem:[%s272 + $0x28] sm:$0xff] %v283
                %v285 = vld [vmem:[%s271 + $0x30] sm:$0xff]
                %286 = vst [vmem:[%s272 + $0x30] sm:$0xff] %v285
                %v287 = vld [vmem:[%s271 + $0x38] sm:$0xff]
                %288 = vst [vmem:[%s272 + $0x38] sm:$0xff] %v287
                %v289 = vld [vmem:[%s271 + $0x40] sm:$0xff]
                %290 = vst [vmem:[%s272 + $0x40] sm:$0xff] %v289
                %v291 = vld [vmem:[%s271 + $0x48] sm:$0xff]
                %292 = vst [vmem:[%s272 + $0x48] sm:$0xff] %v291
                %v293 = vld [vmem:[%s271 + $0x50] sm:$0xff]
                %294 = vst [vmem:[%s272 + $0x50] sm:$0xff] %v293
                %v295 = vld [vmem:[%s271 + $0x58] sm:$0xff]
                %296 = vst [vmem:[%s272 + $0x58] sm:$0xff] %v295
                %v297 = vld [vmem:[%s271 + $0x60] sm:$0xff]
                %298 = vst [vmem:[%s272 + $0x60] sm:$0xff] %v297
                %v299 = vld [vmem:[%s271 + $0x68] sm:$0xff]
                %300 = vst [vmem:[%s272 + $0x68] sm:$0xff] %v299
                %v301 = vld [vmem:[%s271 + $0x70] sm:$0xff]
                %302 = vst [vmem:[%s272 + $0x70] sm:$0xff] %v301
                %v303 = vld [vmem:[%s271 + $0x78] sm:$0xff]
                %304 = vst [vmem:[%s272 + $0x78] sm:$0xff] %v303
                %v305 = vld [vmem:[%s271 + $0x100] sm:$0xff]
                %306 = vst [vmem:[%s272 + $0x80] sm:$0xff] %v305
                %v307 = vld [vmem:[%s271 + $0x108] sm:$0xff]
                %308 = vst [vmem:[%s272 + $0x88] sm:$0xff] %v307
                %v309 = vld [vmem:[%s271 + $0x110] sm:$0xff]
                %310 = vst [vmem:[%s272 + $0x90] sm:$0xff] %v309
                %v311 = vld [vmem:[%s271 + $0x118] sm:$0xff]
                %312 = vst [vmem:[%s272 + $0x98] sm:$0xff] %v311
                %v313 = vld [vmem:[%s271 + $0x120] sm:$0xff]
                %314 = vst [vmem:[%s272 + $0xa0] sm:$0xff] %v313
                %v315 = vld [vmem:[%s271 + $0x128] sm:$0xff]
                %316 = vst [vmem:[%s272 + $0xa8] sm:$0xff] %v315
                %v317 = vld [vmem:[%s271 + $0x130] sm:$0xff]
                %318 = vst [vmem:[%s272 + $0xb0] sm:$0xff] %v317
                %v319 = vld [vmem:[%s271 + $0x138] sm:$0xff]
                %320 = vst [vmem:[%s272 + $0xb8] sm:$0xff] %v319
                %v321 = vld [vmem:[%s271 + $0x140] sm:$0xff]
                %322 = vst [vmem:[%s272 + $0xc0] sm:$0xff] %v321
                %v323 = vld [vmem:[%s271 + $0x148] sm:$0xff]
                %324 = vst [vmem:[%s272 + $0xc8] sm:$0xff] %v323
                %v325 = vld [vmem:[%s271 + $0x150] sm:$0xff]
                %326 = vst [vmem:[%s272 + $0xd0] sm:$0xff] %v325
                %v327 = vld [vmem:[%s271 + $0x158] sm:$0xff]
                %328 = vst [vmem:[%s272 + $0xd8] sm:$0xff] %v327
                %v329 = vld [vmem:[%s271 + $0x160] sm:$0xff]
                %330 = vst [vmem:[%s272 + $0xe0] sm:$0xff] %v329
                %v331 = vld [vmem:[%s271 + $0x168] sm:$0xff]
                %332 = vst [vmem:[%s272 + $0xe8] sm:$0xff] %v331
                %v333 = vld [vmem:[%s271 + $0x170] sm:$0xff]
                %334 = vst [vmem:[%s272 + $0xf0] sm:$0xff] %v333
                %v335 = vld [vmem:[%s271 + $0x178] sm:$0xff]
                %336 = vst [vmem:[%s272 + $0xf8] sm:$0xff] %v335
              $region41: #{tpu_custom_call.1} parent=35 // loop_footer
                %s270 = sadd.s32 1, %s266
              $region42: #{tpu_custom_call.1} parent=35 // loop_footer_branch
                %265 = sbr.rel target = $region38
              $region43: #{tpu_custom_call.1} parent=35 // loop_exit
                _
            $region36: #{tpu_custom_call.1} parent=27 // pred_fallthru
              _
          $region28: #{tpu_custom_call.1} parent=23 // pred_fallthru
            _
          %413 = vnop
        $region24: #{tpu_custom_call.1} parent=15 // pred_fallthru
          _
        // Predicated region
        $region59: #{tpu_custom_call.1} parent=15 // pred_check
          %p414 = pneg %p116
        $region60: #{tpu_custom_call.1} parent=15 // pred_check_branch
          %416 = sbr.rel (%p414) target = $region62
        $region61: #{tpu_custom_call.1} parent=15 // pred_region
          %s417 = sand.u32 %s106, 1
          %s418 = sand.u32 %s106, 1
          %s419 = smul.addr %s418, 256
          %s420 = scalar_lea.vmem [#allocation5], %s419
          %s421 = smul.u32 2, %s23
          %s422 = smul.u32 16, %s24
          %s423 = smul.addr %s421, 32
          %s424 = sadd.s32 %s422, %s423
          %s425 = smul.addr %s22, 64
          %s426 = sadd.s32 %s424, %s425
          %s427 = smul.addr %s426, 8
          %s428 = scalar_lea.vmem %s2, %s427
          // Predicated region
          $region63: #{tpu_custom_call.1} parent=61 // pred_check
            _
          $region64: #{tpu_custom_call.1} parent=61 // pred_check_branch
            %430 = sbr.rel (0) target = $region66
          $region65: #{tpu_custom_call.1} parent=61 // pred_region
            // Predicated region
            $region67: #{tpu_custom_call.1} parent=65 // pred_check
              _
            $region68: #{tpu_custom_call.1} parent=65 // pred_check_branch
              %432 = sbr.rel (0) target = $region70
            $region69: #{tpu_custom_call.1} parent=65 // pred_region
              // Predicated region
              $region82: #{tpu_custom_call.1} parent=69 // pred_check
                _
              $region83: #{tpu_custom_call.1} parent=69 // pred_check_branch
                %509 = sbr.rel (0) target = $region85
              $region84: #{tpu_custom_call.1} parent=69 // pred_region
                loop: start=0, step=1, limit=1
                $region86: #{tpu_custom_call.1} parent=84 // loop_pre_header
                  _
                $region87: #{tpu_custom_call.1} parent=84 // loop_header
                  %s511 = sphi 0, %s515
                  %p512 = scmp.ge.s32.totalorder %s511, 1
                  %s516 = sphi %s428, %s428
                  %s517 = sphi %s420, %s420
                $region88: #{tpu_custom_call.1} parent=84 // loop_header_branch
                  %514 = sbr.rel (%p512) target = $region92
                $region89: #{tpu_custom_call.1} parent=84 // loop_body
                  %v518 = vld [vmem:[%s516] sm:$0xff]
                  %519 = vst [vmem:[%s517] sm:$0xff] %v518
                  %v520 = vld [vmem:[%s516 + $0x8] sm:$0xff]
                  %521 = vst [vmem:[%s517 + $0x8] sm:$0xff] %v520
                  %v522 = vld [vmem:[%s516 + $0x10] sm:$0xff]
                  %523 = vst [vmem:[%s517 + $0x10] sm:$0xff] %v522
                  %v524 = vld [vmem:[%s516 + $0x18] sm:$0xff]
                  %525 = vst [vmem:[%s517 + $0x18] sm:$0xff] %v524
                  %v526 = vld [vmem:[%s516 + $0x20] sm:$0xff]
                  %527 = vst [vmem:[%s517 + $0x20] sm:$0xff] %v526
                  %v528 = vld [vmem:[%s516 + $0x28] sm:$0xff]
                  %529 = vst [vmem:[%s517 + $0x28] sm:$0xff] %v528
                  %v530 = vld [vmem:[%s516 + $0x30] sm:$0xff]
                  %531 = vst [vmem:[%s517 + $0x30] sm:$0xff] %v530
                  %v532 = vld [vmem:[%s516 + $0x38] sm:$0xff]
                  %533 = vst [vmem:[%s517 + $0x38] sm:$0xff] %v532
                  %v534 = vld [vmem:[%s516 + $0x40] sm:$0xff]
                  %535 = vst [vmem:[%s517 + $0x40] sm:$0xff] %v534
                  %v536 = vld [vmem:[%s516 + $0x48] sm:$0xff]
                  %537 = vst [vmem:[%s517 + $0x48] sm:$0xff] %v536
                  %v538 = vld [vmem:[%s516 + $0x50] sm:$0xff]
                  %539 = vst [vmem:[%s517 + $0x50] sm:$0xff] %v538
                  %v540 = vld [vmem:[%s516 + $0x58] sm:$0xff]
                  %541 = vst [vmem:[%s517 + $0x58] sm:$0xff] %v540
                  %v542 = vld [vmem:[%s516 + $0x60] sm:$0xff]
                  %543 = vst [vmem:[%s517 + $0x60] sm:$0xff] %v542
                  %v544 = vld [vmem:[%s516 + $0x68] sm:$0xff]
                  %545 = vst [vmem:[%s517 + $0x68] sm:$0xff] %v544
                  %v546 = vld [vmem:[%s516 + $0x70] sm:$0xff]
                  %547 = vst [vmem:[%s517 + $0x70] sm:$0xff] %v546
                  %v548 = vld [vmem:[%s516 + $0x78] sm:$0xff]
                  %549 = vst [vmem:[%s517 + $0x78] sm:$0xff] %v548
                  %v550 = vld [vmem:[%s516 + $0x100] sm:$0xff]
                  %551 = vst [vmem:[%s517 + $0x80] sm:$0xff] %v550
                  %v552 = vld [vmem:[%s516 + $0x108] sm:$0xff]
                  %553 = vst [vmem:[%s517 + $0x88] sm:$0xff] %v552
                  %v554 = vld [vmem:[%s516 + $0x110] sm:$0xff]
                  %555 = vst [vmem:[%s517 + $0x90] sm:$0xff] %v554
                  %v556 = vld [vmem:[%s516 + $0x118] sm:$0xff]
                  %557 = vst [vmem:[%s517 + $0x98] sm:$0xff] %v556
                  %v558 = vld [vmem:[%s516 + $0x120] sm:$0xff]
                  %559 = vst [vmem:[%s517 + $0xa0] sm:$0xff] %v558
                  %v560 = vld [vmem:[%s516 + $0x128] sm:$0xff]
                  %561 = vst [vmem:[%s517 + $0xa8] sm:$0xff] %v560
                  %v562 = vld [vmem:[%s516 + $0x130] sm:$0xff]
                  %563 = vst [vmem:[%s517 + $0xb0] sm:$0xff] %v562
                  %v564 = vld [vmem:[%s516 + $0x138] sm:$0xff]
                  %565 = vst [vmem:[%s517 + $0xb8] sm:$0xff] %v564
                  %v566 = vld [vmem:[%s516 + $0x140] sm:$0xff]
                  %567 = vst [vmem:[%s517 + $0xc0] sm:$0xff] %v566
                  %v568 = vld [vmem:[%s516 + $0x148] sm:$0xff]
                  %569 = vst [vmem:[%s517 + $0xc8] sm:$0xff] %v568
                  %v570 = vld [vmem:[%s516 + $0x150] sm:$0xff]
                  %571 = vst [vmem:[%s517 + $0xd0] sm:$0xff] %v570
                  %v572 = vld [vmem:[%s516 + $0x158] sm:$0xff]
                  %573 = vst [vmem:[%s517 + $0xd8] sm:$0xff] %v572
                  %v574 = vld [vmem:[%s516 + $0x160] sm:$0xff]
                  %575 = vst [vmem:[%s517 + $0xe0] sm:$0xff] %v574
                  %v576 = vld [vmem:[%s516 + $0x168] sm:$0xff]
                  %577 = vst [vmem:[%s517 + $0xe8] sm:$0xff] %v576
                  %v578 = vld [vmem:[%s516 + $0x170] sm:$0xff]
                  %579 = vst [vmem:[%s517 + $0xf0] sm:$0xff] %v578
                  %v580 = vld [vmem:[%s516 + $0x178] sm:$0xff]
                  %581 = vst [vmem:[%s517 + $0xf8] sm:$0xff] %v580
                $region90: #{tpu_custom_call.1} parent=84 // loop_footer
                  %s515 = sadd.s32 1, %s511
                $region91: #{tpu_custom_call.1} parent=84 // loop_footer_branch
                  %510 = sbr.rel target = $region87
                $region92: #{tpu_custom_call.1} parent=84 // loop_exit
                  _
              $region85: #{tpu_custom_call.1} parent=69 // pred_fallthru
                _
              // Predicated region
              $region93: #{tpu_custom_call.1} parent=69 // pred_check
                _
              $region94: #{tpu_custom_call.1} parent=69 // pred_check_branch
                %583 = sbr.rel target = $region96
              $region95: #{tpu_custom_call.1} parent=69 // pred_region
                _
              $region96: #{tpu_custom_call.1} parent=69 // pred_fallthru
                _
            $region70: #{tpu_custom_call.1} parent=65 // pred_fallthru
              _
            // Predicated region
            $region71: #{tpu_custom_call.1} parent=65 // pred_check
              _
            $region72: #{tpu_custom_call.1} parent=65 // pred_check_branch
              %434 = sbr.rel target = $region74
            $region73: #{tpu_custom_call.1} parent=65 // pred_region
              loop: start=0, step=1, limit=1
              $region75: #{tpu_custom_call.1} parent=73 // loop_pre_header
                _
              $region76: #{tpu_custom_call.1} parent=73 // loop_header
                %s437 = sphi 0, %s441
                %p438 = scmp.ge.s32.totalorder %s437, 1
                %s442 = sphi %s428, %s428
                %s443 = sphi %s420, %s420
              $region77: #{tpu_custom_call.1} parent=73 // loop_header_branch
                %440 = sbr.rel (%p438) target = $region81
              $region78: #{tpu_custom_call.1} parent=73 // loop_body
                %v444 = vld [vmem:[%s442] sm:$0xff]
                %445 = vst [vmem:[%s443] sm:$0xff] %v444
                %v446 = vld [vmem:[%s442 + $0x8] sm:$0xff]
                %447 = vst [vmem:[%s443 + $0x8] sm:$0xff] %v446
                %v448 = vld [vmem:[%s442 + $0x10] sm:$0xff]
                %449 = vst [vmem:[%s443 + $0x10] sm:$0xff] %v448
                %v450 = vld [vmem:[%s442 + $0x18] sm:$0xff]
                %451 = vst [vmem:[%s443 + $0x18] sm:$0xff] %v450
                %v452 = vld [vmem:[%s442 + $0x20] sm:$0xff]
                %453 = vst [vmem:[%s443 + $0x20] sm:$0xff] %v452
                %v454 = vld [vmem:[%s442 + $0x28] sm:$0xff]
                %455 = vst [vmem:[%s443 + $0x28] sm:$0xff] %v454
                %v456 = vld [vmem:[%s442 + $0x30] sm:$0xff]
                %457 = vst [vmem:[%s443 + $0x30] sm:$0xff] %v456
                %v458 = vld [vmem:[%s442 + $0x38] sm:$0xff]
                %459 = vst [vmem:[%s443 + $0x38] sm:$0xff] %v458
                %v460 = vld [vmem:[%s442 + $0x40] sm:$0xff]
                %461 = vst [vmem:[%s443 + $0x40] sm:$0xff] %v460
                %v462 = vld [vmem:[%s442 + $0x48] sm:$0xff]
                %463 = vst [vmem:[%s443 + $0x48] sm:$0xff] %v462
                %v464 = vld [vmem:[%s442 + $0x50] sm:$0xff]
                %465 = vst [vmem:[%s443 + $0x50] sm:$0xff] %v464
                %v466 = vld [vmem:[%s442 + $0x58] sm:$0xff]
                %467 = vst [vmem:[%s443 + $0x58] sm:$0xff] %v466
                %v468 = vld [vmem:[%s442 + $0x60] sm:$0xff]
                %469 = vst [vmem:[%s443 + $0x60] sm:$0xff] %v468
                %v470 = vld [vmem:[%s442 + $0x68] sm:$0xff]
                %471 = vst [vmem:[%s443 + $0x68] sm:$0xff] %v470
                %v472 = vld [vmem:[%s442 + $0x70] sm:$0xff]
                %473 = vst [vmem:[%s443 + $0x70] sm:$0xff] %v472
                %v474 = vld [vmem:[%s442 + $0x78] sm:$0xff]
                %475 = vst [vmem:[%s443 + $0x78] sm:$0xff] %v474
                %v476 = vld [vmem:[%s442 + $0x100] sm:$0xff]
                %477 = vst [vmem:[%s443 + $0x80] sm:$0xff] %v476
                %v478 = vld [vmem:[%s442 + $0x108] sm:$0xff]
                %479 = vst [vmem:[%s443 + $0x88] sm:$0xff] %v478
                %v480 = vld [vmem:[%s442 + $0x110] sm:$0xff]
                %481 = vst [vmem:[%s443 + $0x90] sm:$0xff] %v480
                %v482 = vld [vmem:[%s442 + $0x118] sm:$0xff]
                %483 = vst [vmem:[%s443 + $0x98] sm:$0xff] %v482
                %v484 = vld [vmem:[%s442 + $0x120] sm:$0xff]
                %485 = vst [vmem:[%s443 + $0xa0] sm:$0xff] %v484
                %v486 = vld [vmem:[%s442 + $0x128] sm:$0xff]
                %487 = vst [vmem:[%s443 + $0xa8] sm:$0xff] %v486
                %v488 = vld [vmem:[%s442 + $0x130] sm:$0xff]
                %489 = vst [vmem:[%s443 + $0xb0] sm:$0xff] %v488
                %v490 = vld [vmem:[%s442 + $0x138] sm:$0xff]
                %491 = vst [vmem:[%s443 + $0xb8] sm:$0xff] %v490
                %v492 = vld [vmem:[%s442 + $0x140] sm:$0xff]
                %493 = vst [vmem:[%s443 + $0xc0] sm:$0xff] %v492
                %v494 = vld [vmem:[%s442 + $0x148] sm:$0xff]
                %495 = vst [vmem:[%s443 + $0xc8] sm:$0xff] %v494
                %v496 = vld [vmem:[%s442 + $0x150] sm:$0xff]
                %497 = vst [vmem:[%s443 + $0xd0] sm:$0xff] %v496
                %v498 = vld [vmem:[%s442 + $0x158] sm:$0xff]
                %499 = vst [vmem:[%s443 + $0xd8] sm:$0xff] %v498
                %v500 = vld [vmem:[%s442 + $0x160] sm:$0xff]
                %501 = vst [vmem:[%s443 + $0xe0] sm:$0xff] %v500
                %v502 = vld [vmem:[%s442 + $0x168] sm:$0xff]
                %503 = vst [vmem:[%s443 + $0xe8] sm:$0xff] %v502
                %v504 = vld [vmem:[%s442 + $0x170] sm:$0xff]
                %505 = vst [vmem:[%s443 + $0xf0] sm:$0xff] %v504
                %v506 = vld [vmem:[%s442 + $0x178] sm:$0xff]
                %507 = vst [vmem:[%s443 + $0xf8] sm:$0xff] %v506
              $region79: #{tpu_custom_call.1} parent=73 // loop_footer
                %s441 = sadd.s32 1, %s437
              $region80: #{tpu_custom_call.1} parent=73 // loop_footer_branch
                %436 = sbr.rel target = $region76
              $region81: #{tpu_custom_call.1} parent=73 // loop_exit
                _
            $region74: #{tpu_custom_call.1} parent=65 // pred_fallthru
              _
          $region66: #{tpu_custom_call.1} parent=61 // pred_fallthru
            _
          %584 = vnop
        $region62: #{tpu_custom_call.1} parent=15 // pred_fallthru
          _
        // Predicated region
        $region97: #{tpu_custom_call.1} parent=15 // pred_check
          %p585 = pneg %p146
        $region98: #{tpu_custom_call.1} parent=15 // pred_check_branch
          %587 = sbr.rel (%p585) target = $region100
        $region99: #{tpu_custom_call.1} parent=15 // pred_region
          %s588 = sand.u32 %s136, 1
          %s589 = sand.u32 %s136, 1
          %s590 = smul.addr %s589, 256
          %s591 = scalar_lea.vmem [#allocation6], %s590
          %s592 = smul.u32 2, %s23
          %s593 = smul.addr %s592, 32
          %s594 = sadd.s32 %s24, %s593
          %s595 = smul.addr %s22, 64
          %s596 = sadd.s32 %s594, %s595
          %s597 = smul.addr %s596, 8
          %s598 = scalar_lea.vmem %s3, %s597
          // Predicated region
          $region101: #{tpu_custom_call.1} parent=99 // pred_check
            _
          $region102: #{tpu_custom_call.1} parent=99 // pred_check_branch
            %600 = sbr.rel (0) target = $region104
          $region103: #{tpu_custom_call.1} parent=99 // pred_region
            // Predicated region
            $region105: #{tpu_custom_call.1} parent=103 // pred_check
              _
            $region106: #{tpu_custom_call.1} parent=103 // pred_check_branch
              %602 = sbr.rel (0) target = $region108
            $region107: #{tpu_custom_call.1} parent=103 // pred_region
              // Predicated region
              $region120: #{tpu_custom_call.1} parent=107 // pred_check
                _
              $region121: #{tpu_custom_call.1} parent=107 // pred_check_branch
                %679 = sbr.rel (0) target = $region123
              $region122: #{tpu_custom_call.1} parent=107 // pred_region
                loop: start=0, step=1, limit=1
                $region124: #{tpu_custom_call.1} parent=122 // loop_pre_header
                  _
                $region125: #{tpu_custom_call.1} parent=122 // loop_header
                  %s681 = sphi 0, %s685
                  %p682 = scmp.ge.s32.totalorder %s681, 1
                  %s686 = sphi %s598, %s598
                  %s687 = sphi %s591, %s591
                $region126: #{tpu_custom_call.1} parent=122 // loop_header_branch
                  %684 = sbr.rel (%p682) target = $region130
                $region127: #{tpu_custom_call.1} parent=122 // loop_body
                  %v688 = vld [vmem:[%s686] sm:$0xff]
                  %689 = vst [vmem:[%s687] sm:$0xff] %v688
                  %v690 = vld [vmem:[%s686 + $0x10] sm:$0xff]
                  %691 = vst [vmem:[%s687 + $0x8] sm:$0xff] %v690
                  %v692 = vld [vmem:[%s686 + $0x20] sm:$0xff]
                  %693 = vst [vmem:[%s687 + $0x10] sm:$0xff] %v692
                  %v694 = vld [vmem:[%s686 + $0x30] sm:$0xff]
                  %695 = vst [vmem:[%s687 + $0x18] sm:$0xff] %v694
                  %v696 = vld [vmem:[%s686 + $0x40] sm:$0xff]
                  %697 = vst [vmem:[%s687 + $0x20] sm:$0xff] %v696
                  %v698 = vld [vmem:[%s686 + $0x50] sm:$0xff]
                  %699 = vst [vmem:[%s687 + $0x28] sm:$0xff] %v698
                  %v700 = vld [vmem:[%s686 + $0x60] sm:$0xff]
                  %701 = vst [vmem:[%s687 + $0x30] sm:$0xff] %v700
                  %v702 = vld [vmem:[%s686 + $0x70] sm:$0xff]
                  %703 = vst [vmem:[%s687 + $0x38] sm:$0xff] %v702
                  %v704 = vld [vmem:[%s686 + $0x80] sm:$0xff]
                  %705 = vst [vmem:[%s687 + $0x40] sm:$0xff] %v704
                  %v706 = vld [vmem:[%s686 + $0x90] sm:$0xff]
                  %707 = vst [vmem:[%s687 + $0x48] sm:$0xff] %v706
                  %v708 = vld [vmem:[%s686 + $0xa0] sm:$0xff]
                  %709 = vst [vmem:[%s687 + $0x50] sm:$0xff] %v708
                  %v710 = vld [vmem:[%s686 + $0xb0] sm:$0xff]
                  %711 = vst [vmem:[%s687 + $0x58] sm:$0xff] %v710
                  %v712 = vld [vmem:[%s686 + $0xc0] sm:$0xff]
                  %713 = vst [vmem:[%s687 + $0x60] sm:$0xff] %v712
                  %v714 = vld [vmem:[%s686 + $0xd0] sm:$0xff]
                  %715 = vst [vmem:[%s687 + $0x68] sm:$0xff] %v714
                  %v716 = vld [vmem:[%s686 + $0xe0] sm:$0xff]
                  %717 = vst [vmem:[%s687 + $0x70] sm:$0xff] %v716
                  %v718 = vld [vmem:[%s686 + $0xf0] sm:$0xff]
                  %719 = vst [vmem:[%s687 + $0x78] sm:$0xff] %v718
                  %v720 = vld [vmem:[%s686 + $0x100] sm:$0xff]
                  %721 = vst [vmem:[%s687 + $0x80] sm:$0xff] %v720
                  %v722 = vld [vmem:[%s686 + $0x110] sm:$0xff]
                  %723 = vst [vmem:[%s687 + $0x88] sm:$0xff] %v722
                  %v724 = vld [vmem:[%s686 + $0x120] sm:$0xff]
                  %725 = vst [vmem:[%s687 + $0x90] sm:$0xff] %v724
                  %v726 = vld [vmem:[%s686 + $0x130] sm:$0xff]
                  %727 = vst [vmem:[%s687 + $0x98] sm:$0xff] %v726
                  %v728 = vld [vmem:[%s686 + $0x140] sm:$0xff]
                  %729 = vst [vmem:[%s687 + $0xa0] sm:$0xff] %v728
                  %v730 = vld [vmem:[%s686 + $0x150] sm:$0xff]
                  %731 = vst [vmem:[%s687 + $0xa8] sm:$0xff] %v730
                  %v732 = vld [vmem:[%s686 + $0x160] sm:$0xff]
                  %733 = vst [vmem:[%s687 + $0xb0] sm:$0xff] %v732
                  %v734 = vld [vmem:[%s686 + $0x170] sm:$0xff]
                  %735 = vst [vmem:[%s687 + $0xb8] sm:$0xff] %v734
                  %v736 = vld [vmem:[%s686 + $0x180] sm:$0xff]
                  %737 = vst [vmem:[%s687 + $0xc0] sm:$0xff] %v736
                  %v738 = vld [vmem:[%s686 + $0x190] sm:$0xff]
                  %739 = vst [vmem:[%s687 + $0xc8] sm:$0xff] %v738
                  %v740 = vld [vmem:[%s686 + $0x1a0] sm:$0xff]
                  %741 = vst [vmem:[%s687 + $0xd0] sm:$0xff] %v740
                  %v742 = vld [vmem:[%s686 + $0x1b0] sm:$0xff]
                  %743 = vst [vmem:[%s687 + $0xd8] sm:$0xff] %v742
                  %v744 = vld [vmem:[%s686 + $0x1c0] sm:$0xff]
                  %745 = vst [vmem:[%s687 + $0xe0] sm:$0xff] %v744
                  %v746 = vld [vmem:[%s686 + $0x1d0] sm:$0xff]
                  %747 = vst [vmem:[%s687 + $0xe8] sm:$0xff] %v746
                  %v748 = vld [vmem:[%s686 + $0x1e0] sm:$0xff]
                  %749 = vst [vmem:[%s687 + $0xf0] sm:$0xff] %v748
                  %v750 = vld [vmem:[%s686 + $0x1f0] sm:$0xff]
                  %751 = vst [vmem:[%s687 + $0xf8] sm:$0xff] %v750
                $region128: #{tpu_custom_call.1} parent=122 // loop_footer
                  %s685 = sadd.s32 1, %s681
                $region129: #{tpu_custom_call.1} parent=122 // loop_footer_branch
                  %680 = sbr.rel target = $region125
                $region130: #{tpu_custom_call.1} parent=122 // loop_exit
                  _
              $region123: #{tpu_custom_call.1} parent=107 // pred_fallthru
                _
              // Predicated region
              $region131: #{tpu_custom_call.1} parent=107 // pred_check
                _
              $region132: #{tpu_custom_call.1} parent=107 // pred_check_branch
                %753 = sbr.rel target = $region134
              $region133: #{tpu_custom_call.1} parent=107 // pred_region
                _
              $region134: #{tpu_custom_call.1} parent=107 // pred_fallthru
                _
            $region108: #{tpu_custom_call.1} parent=103 // pred_fallthru
              _
            // Predicated region
            $region109: #{tpu_custom_call.1} parent=103 // pred_check
              _
            $region110: #{tpu_custom_call.1} parent=103 // pred_check_branch
              %604 = sbr.rel target = $region112
            $region111: #{tpu_custom_call.1} parent=103 // pred_region
              loop: start=0, step=1, limit=1
              $region113: #{tpu_custom_call.1} parent=111 // loop_pre_header
                _
              $region114: #{tpu_custom_call.1} parent=111 // loop_header
                %s607 = sphi 0, %s611
                %p608 = scmp.ge.s32.totalorder %s607, 1
                %s612 = sphi %s598, %s598
                %s613 = sphi %s591, %s591
              $region115: #{tpu_custom_call.1} parent=111 // loop_header_branch
                %610 = sbr.rel (%p608) target = $region119
              $region116: #{tpu_custom_call.1} parent=111 // loop_body
                %v614 = vld [vmem:[%s612] sm:$0xff]
                %615 = vst [vmem:[%s613] sm:$0xff] %v614
                %v616 = vld [vmem:[%s612 + $0x10] sm:$0xff]
                %617 = vst [vmem:[%s613 + $0x8] sm:$0xff] %v616
                %v618 = vld [vmem:[%s612 + $0x20] sm:$0xff]
                %619 = vst [vmem:[%s613 + $0x10] sm:$0xff] %v618
                %v620 = vld [vmem:[%s612 + $0x30] sm:$0xff]
                %621 = vst [vmem:[%s613 + $0x18] sm:$0xff] %v620
                %v622 = vld [vmem:[%s612 + $0x40] sm:$0xff]
                %623 = vst [vmem:[%s613 + $0x20] sm:$0xff] %v622
                %v624 = vld [vmem:[%s612 + $0x50] sm:$0xff]
                %625 = vst [vmem:[%s613 + $0x28] sm:$0xff] %v624
                %v626 = vld [vmem:[%s612 + $0x60] sm:$0xff]
                %627 = vst [vmem:[%s613 + $0x30] sm:$0xff] %v626
                %v628 = vld [vmem:[%s612 + $0x70] sm:$0xff]
                %629 = vst [vmem:[%s613 + $0x38] sm:$0xff] %v628
                %v630 = vld [vmem:[%s612 + $0x80] sm:$0xff]
                %631 = vst [vmem:[%s613 + $0x40] sm:$0xff] %v630
                %v632 = vld [vmem:[%s612 + $0x90] sm:$0xff]
                %633 = vst [vmem:[%s613 + $0x48] sm:$0xff] %v632
                %v634 = vld [vmem:[%s612 + $0xa0] sm:$0xff]
                %635 = vst [vmem:[%s613 + $0x50] sm:$0xff] %v634
                %v636 = vld [vmem:[%s612 + $0xb0] sm:$0xff]
                %637 = vst [vmem:[%s613 + $0x58] sm:$0xff] %v636
                %v638 = vld [vmem:[%s612 + $0xc0] sm:$0xff]
                %639 = vst [vmem:[%s613 + $0x60] sm:$0xff] %v638
                %v640 = vld [vmem:[%s612 + $0xd0] sm:$0xff]
                %641 = vst [vmem:[%s613 + $0x68] sm:$0xff] %v640
                %v642 = vld [vmem:[%s612 + $0xe0] sm:$0xff]
                %643 = vst [vmem:[%s613 + $0x70] sm:$0xff] %v642
                %v644 = vld [vmem:[%s612 + $0xf0] sm:$0xff]
                %645 = vst [vmem:[%s613 + $0x78] sm:$0xff] %v644
                %v646 = vld [vmem:[%s612 + $0x100] sm:$0xff]
                %647 = vst [vmem:[%s613 + $0x80] sm:$0xff] %v646
                %v648 = vld [vmem:[%s612 + $0x110] sm:$0xff]
                %649 = vst [vmem:[%s613 + $0x88] sm:$0xff] %v648
                %v650 = vld [vmem:[%s612 + $0x120] sm:$0xff]
                %651 = vst [vmem:[%s613 + $0x90] sm:$0xff] %v650
                %v652 = vld [vmem:[%s612 + $0x130] sm:$0xff]
                %653 = vst [vmem:[%s613 + $0x98] sm:$0xff] %v652
                %v654 = vld [vmem:[%s612 + $0x140] sm:$0xff]
                %655 = vst [vmem:[%s613 + $0xa0] sm:$0xff] %v654
                %v656 = vld [vmem:[%s612 + $0x150] sm:$0xff]
                %657 = vst [vmem:[%s613 + $0xa8] sm:$0xff] %v656
                %v658 = vld [vmem:[%s612 + $0x160] sm:$0xff]
                %659 = vst [vmem:[%s613 + $0xb0] sm:$0xff] %v658
                %v660 = vld [vmem:[%s612 + $0x170] sm:$0xff]
                %661 = vst [vmem:[%s613 + $0xb8] sm:$0xff] %v660
                %v662 = vld [vmem:[%s612 + $0x180] sm:$0xff]
                %663 = vst [vmem:[%s613 + $0xc0] sm:$0xff] %v662
                %v664 = vld [vmem:[%s612 + $0x190] sm:$0xff]
                %665 = vst [vmem:[%s613 + $0xc8] sm:$0xff] %v664
                %v666 = vld [vmem:[%s612 + $0x1a0] sm:$0xff]
                %667 = vst [vmem:[%s613 + $0xd0] sm:$0xff] %v666
                %v668 = vld [vmem:[%s612 + $0x1b0] sm:$0xff]
                %669 = vst [vmem:[%s613 + $0xd8] sm:$0xff] %v668
                %v670 = vld [vmem:[%s612 + $0x1c0] sm:$0xff]
                %671 = vst [vmem:[%s613 + $0xe0] sm:$0xff] %v670
                %v672 = vld [vmem:[%s612 + $0x1d0] sm:$0xff]
                %673 = vst [vmem:[%s613 + $0xe8] sm:$0xff] %v672
                %v674 = vld [vmem:[%s612 + $0x1e0] sm:$0xff]
                %675 = vst [vmem:[%s613 + $0xf0] sm:$0xff] %v674
                %v676 = vld [vmem:[%s612 + $0x1f0] sm:$0xff]
                %677 = vst [vmem:[%s613 + $0xf8] sm:$0xff] %v676
              $region117: #{tpu_custom_call.1} parent=111 // loop_footer
                %s611 = sadd.s32 1, %s607
              $region118: #{tpu_custom_call.1} parent=111 // loop_footer_branch
                %606 = sbr.rel target = $region114
              $region119: #{tpu_custom_call.1} parent=111 // loop_exit
                _
            $region112: #{tpu_custom_call.1} parent=103 // pred_fallthru
              _
          $region104: #{tpu_custom_call.1} parent=99 // pred_fallthru
            _
          %754 = vnop
        $region100: #{tpu_custom_call.1} parent=15 // pred_fallthru
          _
      $region16: #{tpu_custom_call.1} parent=5 // pred_fallthru
        _
      %p755 = scmp.le.s32.totalorder 1, %s15
      %p756 = scmp.lt.s32.totalorder %s15, 5
      %p757 = pnand %p755, %p756
      %p758 = pneg %p757
      // Predicated region
      $region135: #{tpu_custom_call.1} parent=5 // pred_check
        _
      $region136: #{tpu_custom_call.1} parent=5 // pred_check_branch
        %760 = sbr.rel (%p757) target = $region138
      $region137: #{tpu_custom_call.1} parent=5 // pred_region
        %s761 = ssub.s32 %s15, 1
        %s762 = sand.u32 %s79, 1
        %s763 = sand.u32 %s79, 1
        %s764 = smul.addr %s763, 256
        %s765 = scalar_lea.vmem [#allocation4], %s764
        // Predicated region
        $region139: #{tpu_custom_call.1} parent=137 // pred_check
          %p766 = pneg %p92
        $region140: #{tpu_custom_call.1} parent=137 // pred_check_branch
          %768 = sbr.rel (%p766) target = $region142
        $region141: #{tpu_custom_call.1} parent=137 // pred_region
          _
        $region142: #{tpu_custom_call.1} parent=137 // pred_fallthru
          _
        %s769 = sand.u32 %s109, 1
        %s770 = sand.u32 %s109, 1
        %s771 = smul.addr %s770, 256
        %s772 = scalar_lea.vmem [#allocation5], %s771
        // Predicated region
        $region143: #{tpu_custom_call.1} parent=137 // pred_check
          %p773 = pneg %p122
        $region144: #{tpu_custom_call.1} parent=137 // pred_check_branch
          %775 = sbr.rel (%p773) target = $region146
        $region145: #{tpu_custom_call.1} parent=137 // pred_region
          _
        $region146: #{tpu_custom_call.1} parent=137 // pred_fallthru
          _
        %s776 = sand.u32 %s139, 1
        %s777 = sand.u32 %s139, 1
        %s778 = smul.addr %s777, 256
        %s779 = scalar_lea.vmem [#allocation6], %s778
        // Predicated region
        $region147: #{tpu_custom_call.1} parent=137 // pred_check
          %p780 = pneg %p152
        $region148: #{tpu_custom_call.1} parent=137 // pred_check_branch
          %782 = sbr.rel (%p780) target = $region150
        $region149: #{tpu_custom_call.1} parent=137 // pred_region
          _
        $region150: #{tpu_custom_call.1} parent=137 // pred_fallthru
          _
        %s783 = smul.u32 2, %s26
        %p784 = scmp.lt.s32.totalorder %s25, 1
        %s785 = scalar_select %p784, %s25, 1
        %p786 = scmp.lt.s32.totalorder %s783, 1
        %s787 = scalar_select %p786, %s783, 1
        %s788 = smul.addr %s787, 16
        %s789 = smul.addr %s785, 32
        %s790 = sadd.s32 %s788, %s789
        %s791 = smul.addr %s790, 8
        %s792 = scalar_lea.vmem %s0, %s791
        %p793 = pneg %p62
        %p794 = pneg %p59
        %s795 = sand.u32 %s79, 1
        %s796 = sand.u32 %s79, 1
        %s797 = smul.addr %s796, 256
        %s798 = scalar_lea.vmem [#allocation4], %s797
        %p799 = pneg %p92
        %p800 = pneg %p89
        %s801 = sand.u32 %s109, 1
        %s802 = sand.u32 %s109, 1
        %s803 = smul.addr %s802, 256
        %s804 = scalar_lea.vmem [#allocation5], %s803
        %p805 = pneg %p122
        %p806 = pneg %p119
        %s807 = sand.u32 %s139, 1
        %s808 = sand.u32 %s139, 1
        %s809 = smul.addr %s808, 256
        %s810 = scalar_lea.vmem [#allocation6], %s809
        %p811 = pneg %p152
        %p812 = pneg %p149
        %p813 = pneg %p180
        %p814 = pneg %p177
        %s815 = smul.u32 2, %s26
        %p816 = scmp.lt.s32.totalorder %s25, 1
        %s817 = scalar_select %p816, %s25, 1
        %p818 = scmp.lt.s32.totalorder %s815, 1
        %s819 = scalar_select %p818, %s815, 1
        %s820 = smul.addr %s819, 16
        %s821 = smul.addr %s817, 32
        %s822 = sadd.s32 %s820, %s821
        %s823 = smul.addr %s822, 8
        %s824 = scalar_lea.vmem %s4, %s823
        %p825 = pneg %p210
        %p826 = pneg %p207
        %s827 = sand.u32 %s197, 1
        %s828 = scalar_lea.sflag [#allocation8], %s827
        %s829 = sand.u32 %s197, 1
        %s830 = smul.addr %s829, 256
        %s831 = scalar_lea.vmem [#allocation7], %s830
        %s832 = smul.u32 2, %s26
        %p833 = scmp.lt.s32.totalorder %s25, 1
        %s834 = scalar_select %p833, %s25, 1
        %p835 = scmp.lt.s32.totalorder %s832, 1
        %s836 = scalar_select %p835, %s832, 1
        %s837 = smul.addr %s836, 16
        %s838 = smul.addr %s834, 32
        %s839 = sadd.s32 %s837, %s838
        %s840 = smul.addr %s839, 8
        %s841 = scalar_lea.vmem %s0, %s840
        %s842 = smul.u32 2, %s26
        %s843 = smul.u32 2, %s26
        %s844 = smul.u32 16, %s27
        %s845 = smul.u32 2, %s26
        %s846 = smul.u32 16, %s27
        %s847 = smul.u32 2, %s26
        %s848 = smul.u32 2, %s26
        %p849 = scmp.lt.s32.totalorder %s25, 1
        %s850 = scalar_select %p849, %s25, 1
        %p851 = scmp.lt.s32.totalorder %s848, 1
        %s852 = scalar_select %p851, %s848, 1
        %s853 = smul.addr %s852, 16
        %s854 = smul.addr %s850, 32
        %s855 = sadd.s32 %s853, %s854
        %s856 = smul.addr %s855, 8
        %s857 = scalar_lea.vmem %s4, %s856
        %s858 = smul.u32 2, %s26
        %s859 = smul.u32 2, %s26
        %p860 = scmp.eq.s32.totalorder %s27, 0
        // Predicated region
        $region151: #{tpu_custom_call.1} parent=137 // pred_check
          %p861 = pneg %p860
        $region152: #{tpu_custom_call.1} parent=137 // pred_check_branch
          %863 = sbr.rel (%p861) target = $region154
        $region153: #{tpu_custom_call.1} parent=137 // pred_region
          %vm864 = vcmask 261120
          %865 = vst.msk [vmem:[#allocation2] sm:$0xff] %vm864, 0.0
          %866 = vst.msk [vmem:[#allocation2 + $0x8] sm:$0xff] %vm864, 0.0
          %867 = vst.msk [vmem:[#allocation2 + $0x10] sm:$0xff] %vm864, 0.0
          %868 = vst.msk [vmem:[#allocation2 + $0x18] sm:$0xff] %vm864, 0.0
          %869 = vst.msk [vmem:[#allocation2 + $0x20] sm:$0xff] %vm864, 0.0
          %870 = vst.msk [vmem:[#allocation2 + $0x28] sm:$0xff] %vm864, 0.0
          %871 = vst.msk [vmem:[#allocation2 + $0x30] sm:$0xff] %vm864, 0.0
          %872 = vst.msk [vmem:[#allocation2 + $0x38] sm:$0xff] %vm864, 0.0
          %873 = vst.msk [vmem:[#allocation2 + $0x40] sm:$0xff] %vm864, 0.0
          %874 = vst.msk [vmem:[#allocation2 + $0x48] sm:$0xff] %vm864, 0.0
          %875 = vst.msk [vmem:[#allocation2 + $0x50] sm:$0xff] %vm864, 0.0
          %876 = vst.msk [vmem:[#allocation2 + $0x58] sm:$0xff] %vm864, 0.0
          %877 = vst.msk [vmem:[#allocation2 + $0x60] sm:$0xff] %vm864, 0.0
          %878 = vst.msk [vmem:[#allocation2 + $0x68] sm:$0xff] %vm864, 0.0
          %879 = vst.msk [vmem:[#allocation2 + $0x70] sm:$0xff] %vm864, 0.0
          %880 = vst.msk [vmem:[#allocation2 + $0x78] sm:$0xff] %vm864, 0.0
          %881 = vst.msk [vmem:[#allocation2 + $0x80] sm:$0xff] %vm864, 0.0
          %882 = vst.msk [vmem:[#allocation2 + $0x88] sm:$0xff] %vm864, 0.0
          %883 = vst.msk [vmem:[#allocation2 + $0x90] sm:$0xff] %vm864, 0.0
          %884 = vst.msk [vmem:[#allocation2 + $0x98] sm:$0xff] %vm864, 0.0
          %885 = vst.msk [vmem:[#allocation2 + $0xa0] sm:$0xff] %vm864, 0.0
          %886 = vst.msk [vmem:[#allocation2 + $0xa8] sm:$0xff] %vm864, 0.0
          %887 = vst.msk [vmem:[#allocation2 + $0xb0] sm:$0xff] %vm864, 0.0
          %888 = vst.msk [vmem:[#allocation2 + $0xb8] sm:$0xff] %vm864, 0.0
          %889 = vst.msk [vmem:[#allocation2 + $0xc0] sm:$0xff] %vm864, 0.0
          %890 = vst.msk [vmem:[#allocation2 + $0xc8] sm:$0xff] %vm864, 0.0
          %891 = vst.msk [vmem:[#allocation2 + $0xd0] sm:$0xff] %vm864, 0.0
          %892 = vst.msk [vmem:[#allocation2 + $0xd8] sm:$0xff] %vm864, 0.0
          %893 = vst.msk [vmem:[#allocation2 + $0xe0] sm:$0xff] %vm864, 0.0
          %894 = vst.msk [vmem:[#allocation2 + $0xe8] sm:$0xff] %vm864, 0.0
          %895 = vst.msk [vmem:[#allocation2 + $0xf0] sm:$0xff] %vm864, 0.0
          %896 = vst.msk [vmem:[#allocation2 + $0xf8] sm:$0xff] %vm864, 0.0
          %v897 = vld [vmem:[%s841] sm:$0xff]
          %v898 = vld [vmem:[%s841 + $0x8] sm:$0xff]
          %v899 = vld [vmem:[%s841 + $0x10] sm:$0xff]
          %v900 = vld [vmem:[%s841 + $0x18] sm:$0xff]
          %v901 = vld [vmem:[%s841 + $0x20] sm:$0xff]
          %v902 = vld [vmem:[%s841 + $0x28] sm:$0xff]
          %v903 = vld [vmem:[%s841 + $0x30] sm:$0xff]
          %v904 = vld [vmem:[%s841 + $0x38] sm:$0xff]
          %v905 = vld [vmem:[%s841 + $0x40] sm:$0xff]
          %v906 = vld [vmem:[%s841 + $0x48] sm:$0xff]
          %v907 = vld [vmem:[%s841 + $0x50] sm:$0xff]
          %v908 = vld [vmem:[%s841 + $0x58] sm:$0xff]
          %v909 = vld [vmem:[%s841 + $0x60] sm:$0xff]
          %v910 = vld [vmem:[%s841 + $0x68] sm:$0xff]
          %v911 = vld [vmem:[%s841 + $0x70] sm:$0xff]
          %v912 = vld [vmem:[%s841 + $0x78] sm:$0xff]
          %v913 = vld [vmem:[%s841 + $0x80] sm:$0xff]
          %v914 = vld [vmem:[%s841 + $0x88] sm:$0xff]
          %v915 = vld [vmem:[%s841 + $0x90] sm:$0xff]
          %v916 = vld [vmem:[%s841 + $0x98] sm:$0xff]
          %v917 = vld [vmem:[%s841 + $0xa0] sm:$0xff]
          %v918 = vld [vmem:[%s841 + $0xa8] sm:$0xff]
          %v919 = vld [vmem:[%s841 + $0xb0] sm:$0xff]
          %v920 = vld [vmem:[%s841 + $0xb8] sm:$0xff]
          %v921 = vld [vmem:[%s841 + $0xc0] sm:$0xff]
          %v922 = vld [vmem:[%s841 + $0xc8] sm:$0xff]
          %v923 = vld [vmem:[%s841 + $0xd0] sm:$0xff]
          %v924 = vld [vmem:[%s841 + $0xd8] sm:$0xff]
          %v925 = vld [vmem:[%s841 + $0xe0] sm:$0xff]
          %v926 = vld [vmem:[%s841 + $0xe8] sm:$0xff]
          %v927 = vld [vmem:[%s841 + $0xf0] sm:$0xff]
          %v928 = vld [vmem:[%s841 + $0xf8] sm:$0xff]
          %v929 = vmul.f32 %v897, 0.17677669
          %v930 = vmul.f32 %v898, 0.17677669
          %v931 = vmul.f32 %v899, 0.17677669
          %v932 = vmul.f32 %v900, 0.17677669
          %v933 = vmul.f32 %v901, 0.17677669
          %v934 = vmul.f32 %v902, 0.17677669
          %v935 = vmul.f32 %v903, 0.17677669
          %v936 = vmul.f32 %v904, 0.17677669
          %v937 = vmul.f32 %v905, 0.17677669
          %v938 = vmul.f32 %v906, 0.17677669
          %v939 = vmul.f32 %v907, 0.17677669
          %v940 = vmul.f32 %v908, 0.17677669
          %v941 = vmul.f32 %v909, 0.17677669
          %v942 = vmul.f32 %v910, 0.17677669
          %v943 = vmul.f32 %v911, 0.17677669
          %v944 = vmul.f32 %v912, 0.17677669
          %v945 = vmul.f32 %v913, 0.17677669
          %v946 = vmul.f32 %v914, 0.17677669
          %v947 = vmul.f32 %v915, 0.17677669
          %v948 = vmul.f32 %v916, 0.17677669
          %v949 = vmul.f32 %v917, 0.17677669
          %v950 = vmul.f32 %v918, 0.17677669
          %v951 = vmul.f32 %v919, 0.17677669
          %v952 = vmul.f32 %v920, 0.17677669
          %v953 = vmul.f32 %v921, 0.17677669
          %v954 = vmul.f32 %v922, 0.17677669
          %v955 = vmul.f32 %v923, 0.17677669
          %v956 = vmul.f32 %v924, 0.17677669
          %v957 = vmul.f32 %v925, 0.17677669
          %v958 = vmul.f32 %v926, 0.17677669
          %v959 = vmul.f32 %v927, 0.17677669
          %v960 = vmul.f32 %v928, 0.17677669
          %961 = vst.msk [vmem:[#allocation3] sm:$0xff] %vm864, %v929
          %962 = vst.msk [vmem:[#allocation3 + $0x8] sm:$0xff] %vm864, %v930
          %963 = vst.msk [vmem:[#allocation3 + $0x10] sm:$0xff] %vm864, %v931
          %964 = vst.msk [vmem:[#allocation3 + $0x18] sm:$0xff] %vm864, %v932
          %965 = vst.msk [vmem:[#allocation3 + $0x20] sm:$0xff] %vm864, %v933
          %966 = vst.msk [vmem:[#allocation3 + $0x28] sm:$0xff] %vm864, %v934
          %967 = vst.msk [vmem:[#allocation3 + $0x30] sm:$0xff] %vm864, %v935
          %968 = vst.msk [vmem:[#allocation3 + $0x38] sm:$0xff] %vm864, %v936
          %969 = vst.msk [vmem:[#allocation3 + $0x40] sm:$0xff] %vm864, %v937
          %970 = vst.msk [vmem:[#allocation3 + $0x48] sm:$0xff] %vm864, %v938
          %971 = vst.msk [vmem:[#allocation3 + $0x50] sm:$0xff] %vm864, %v939
          %972 = vst.msk [vmem:[#allocation3 + $0x58] sm:$0xff] %vm864, %v940
          %973 = vst.msk [vmem:[#allocation3 + $0x60] sm:$0xff] %vm864, %v941
          %974 = vst.msk [vmem:[#allocation3 + $0x68] sm:$0xff] %vm864, %v942
          %975 = vst.msk [vmem:[#allocation3 + $0x70] sm:$0xff] %vm864, %v943
          %976 = vst.msk [vmem:[#allocation3 + $0x78] sm:$0xff] %vm864, %v944
          %977 = vst.msk [vmem:[#allocation3 + $0x80] sm:$0xff] %vm864, %v945
          %978 = vst.msk [vmem:[#allocation3 + $0x88] sm:$0xff] %vm864, %v946
          %979 = vst.msk [vmem:[#allocation3 + $0x90] sm:$0xff] %vm864, %v947
          %980 = vst.msk [vmem:[#allocation3 + $0x98] sm:$0xff] %vm864, %v948
          %981 = vst.msk [vmem:[#allocation3 + $0xa0] sm:$0xff] %vm864, %v949
          %982 = vst.msk [vmem:[#allocation3 + $0xa8] sm:$0xff] %vm864, %v950
          %983 = vst.msk [vmem:[#allocation3 + $0xb0] sm:$0xff] %vm864, %v951
          %984 = vst.msk [vmem:[#allocation3 + $0xb8] sm:$0xff] %vm864, %v952
          %985 = vst.msk [vmem:[#allocation3 + $0xc0] sm:$0xff] %vm864, %v953
          %986 = vst.msk [vmem:[#allocation3 + $0xc8] sm:$0xff] %vm864, %v954
          %987 = vst.msk [vmem:[#allocation3 + $0xd0] sm:$0xff] %vm864, %v955
          %988 = vst.msk [vmem:[#allocation3 + $0xd8] sm:$0xff] %vm864, %v956
          %989 = vst.msk [vmem:[#allocation3 + $0xe0] sm:$0xff] %vm864, %v957
          %990 = vst.msk [vmem:[#allocation3 + $0xe8] sm:$0xff] %vm864, %v958
          %991 = vst.msk [vmem:[#allocation3 + $0xf0] sm:$0xff] %vm864, %v959
          %992 = vst.msk [vmem:[#allocation3 + $0xf8] sm:$0xff] %vm864, %v960
        $region154: #{tpu_custom_call.1} parent=137 // pred_fallthru
          _
        %v993 = vld [vmem:[#allocation3] sm:$0xff]
        %v994 = vld [vmem:[#allocation3 + $0x8] sm:$0xff]
        %v995 = vld [vmem:[#allocation3 + $0x10] sm:$0xff]
        %v996 = vld [vmem:[#allocation3 + $0x18] sm:$0xff]
        %v997 = vld [vmem:[#allocation3 + $0x20] sm:$0xff]
        %v998 = vld [vmem:[#allocation3 + $0x28] sm:$0xff]
        %v999 = vld [vmem:[#allocation3 + $0x30] sm:$0xff]
        %v1000 = vld [vmem:[#allocation3 + $0x38] sm:$0xff]
        %v1001 = vld [vmem:[#allocation3 + $0x40] sm:$0xff]
        %v1002 = vld [vmem:[#allocation3 + $0x48] sm:$0xff]
        %v1003 = vld [vmem:[#allocation3 + $0x50] sm:$0xff]
        %v1004 = vld [vmem:[#allocation3 + $0x58] sm:$0xff]
        %v1005 = vld [vmem:[#allocation3 + $0x60] sm:$0xff]
        %v1006 = vld [vmem:[#allocation3 + $0x68] sm:$0xff]
        %v1007 = vld [vmem:[#allocation3 + $0x70] sm:$0xff]
        %v1008 = vld [vmem:[#allocation3 + $0x78] sm:$0xff]
        %v1009 = vld [vmem:[#allocation3 + $0x80] sm:$0xff]
        %v1010 = vld [vmem:[#allocation3 + $0x88] sm:$0xff]
        %v1011 = vld [vmem:[#allocation3 + $0x90] sm:$0xff]
        %v1012 = vld [vmem:[#allocation3 + $0x98] sm:$0xff]
        %v1013 = vld [vmem:[#allocation3 + $0xa0] sm:$0xff]
        %v1014 = vld [vmem:[#allocation3 + $0xa8] sm:$0xff]
        %v1015 = vld [vmem:[#allocation3 + $0xb0] sm:$0xff]
        %v1016 = vld [vmem:[#allocation3 + $0xb8] sm:$0xff]
        %v1017 = vld [vmem:[#allocation3 + $0xc0] sm:$0xff]
        %v1018 = vld [vmem:[#allocation3 + $0xc8] sm:$0xff]
        %v1019 = vld [vmem:[#allocation3 + $0xd0] sm:$0xff]
        %v1020 = vld [vmem:[#allocation3 + $0xd8] sm:$0xff]
        %v1021 = vld [vmem:[#allocation3 + $0xe0] sm:$0xff]
        %v1022 = vld [vmem:[#allocation3 + $0xe8] sm:$0xff]
        %v1023 = vld [vmem:[#allocation3 + $0xf0] sm:$0xff]
        %v1024 = vld [vmem:[#allocation3 + $0xf8] sm:$0xff]
        %v1025 = vld [vmem:[%s765] sm:$0xff]
        %v1026 = vld [vmem:[%s765 + $0x8] sm:$0xff]
        %v1027 = vld [vmem:[%s765 + $0x10] sm:$0xff]
        %v1028 = vld [vmem:[%s765 + $0x18] sm:$0xff]
        %v1029 = vld [vmem:[%s765 + $0x20] sm:$0xff]
        %v1030 = vld [vmem:[%s765 + $0x28] sm:$0xff]
        %v1031 = vld [vmem:[%s765 + $0x30] sm:$0xff]
        %v1032 = vld [vmem:[%s765 + $0x38] sm:$0xff]
        %v1033 = vld [vmem:[%s765 + $0x40] sm:$0xff]
        %v1034 = vld [vmem:[%s765 + $0x48] sm:$0xff]
        %v1035 = vld [vmem:[%s765 + $0x50] sm:$0xff]
        %v1036 = vld [vmem:[%s765 + $0x58] sm:$0xff]
        %v1037 = vld [vmem:[%s765 + $0x60] sm:$0xff]
        %v1038 = vld [vmem:[%s765 + $0x68] sm:$0xff]
        %v1039 = vld [vmem:[%s765 + $0x70] sm:$0xff]
        %v1040 = vld [vmem:[%s765 + $0x78] sm:$0xff]
        %v1041 = vld [vmem:[%s765 + $0x80] sm:$0xff]
        %v1042 = vld [vmem:[%s765 + $0x88] sm:$0xff]
        %v1043 = vld [vmem:[%s765 + $0x90] sm:$0xff]
        %v1044 = vld [vmem:[%s765 + $0x98] sm:$0xff]
        %v1045 = vld [vmem:[%s765 + $0xa0] sm:$0xff]
        %v1046 = vld [vmem:[%s765 + $0xa8] sm:$0xff]
        %v1047 = vld [vmem:[%s765 + $0xb0] sm:$0xff]
        %v1048 = vld [vmem:[%s765 + $0xb8] sm:$0xff]
        %v1049 = vld [vmem:[%s765 + $0xc0] sm:$0xff]
        %v1050 = vld [vmem:[%s765 + $0xc8] sm:$0xff]
        %v1051 = vld [vmem:[%s765 + $0xd0] sm:$0xff]
        %v1052 = vld [vmem:[%s765 + $0xd8] sm:$0xff]
        %v1053 = vld [vmem:[%s765 + $0xe0] sm:$0xff]
        %v1054 = vld [vmem:[%s765 + $0xe8] sm:$0xff]
        %v1055 = vld [vmem:[%s765 + $0xf0] sm:$0xff]
        %v1056 = vld [vmem:[%s765 + $0xf8] sm:$0xff]
        %v1057 = vld [vmem:[%s772] sm:$0xff]
        %v1058 = vld [vmem:[%s772 + $0x8] sm:$0xff]
        %v1059 = vld [vmem:[%s772 + $0x10] sm:$0xff]
        %v1060 = vld [vmem:[%s772 + $0x18] sm:$0xff]
        %v1061 = vld [vmem:[%s772 + $0x20] sm:$0xff]
        %v1062 = vld [vmem:[%s772 + $0x28] sm:$0xff]
        %v1063 = vld [vmem:[%s772 + $0x30] sm:$0xff]
        %v1064 = vld [vmem:[%s772 + $0x38] sm:$0xff]
        %v1065 = vld [vmem:[%s772 + $0x40] sm:$0xff]
        %v1066 = vld [vmem:[%s772 + $0x48] sm:$0xff]
        %v1067 = vld [vmem:[%s772 + $0x50] sm:$0xff]
        %v1068 = vld [vmem:[%s772 + $0x58] sm:$0xff]
        %v1069 = vld [vmem:[%s772 + $0x60] sm:$0xff]
        %v1070 = vld [vmem:[%s772 + $0x68] sm:$0xff]
        %v1071 = vld [vmem:[%s772 + $0x70] sm:$0xff]
        %v1072 = vld [vmem:[%s772 + $0x78] sm:$0xff]
        %v1073 = vld [vmem:[%s772 + $0x80] sm:$0xff]
        %v1074 = vld [vmem:[%s772 + $0x88] sm:$0xff]
        %v1075 = vld [vmem:[%s772 + $0x90] sm:$0xff]
        %v1076 = vld [vmem:[%s772 + $0x98] sm:$0xff]
        %v1077 = vld [vmem:[%s772 + $0xa0] sm:$0xff]
        %v1078 = vld [vmem:[%s772 + $0xa8] sm:$0xff]
        %v1079 = vld [vmem:[%s772 + $0xb0] sm:$0xff]
        %v1080 = vld [vmem:[%s772 + $0xb8] sm:$0xff]
        %v1081 = vld [vmem:[%s772 + $0xc0] sm:$0xff]
        %v1082 = vld [vmem:[%s772 + $0xc8] sm:$0xff]
        %v1083 = vld [vmem:[%s772 + $0xd0] sm:$0xff]
        %v1084 = vld [vmem:[%s772 + $0xd8] sm:$0xff]
        %v1085 = vld [vmem:[%s772 + $0xe0] sm:$0xff]
        %v1086 = vld [vmem:[%s772 + $0xe8] sm:$0xff]
        %v1087 = vld [vmem:[%s772 + $0xf0] sm:$0xff]
        %v1088 = vld [vmem:[%s772 + $0xf8] sm:$0xff]
        %vm1089 = vcmask 261120
        %v1091 = vsel %vm1089, %v993, 0
        %v1094 = vsel %vm1089, %v994, 0
        %v1097 = vsel %vm1089, %v995, 0
        %v1100 = vsel %vm1089, %v996, 0
        %v1103 = vsel %vm1089, %v997, 0
        %v1106 = vsel %vm1089, %v998, 0
        %v1109 = vsel %vm1089, %v999, 0
        %v1112 = vsel %vm1089, %v1000, 0
        %v1115 = vsel %vm1089, %v1001, 0
        %v1118 = vsel %vm1089, %v1002, 0
        %v1121 = vsel %vm1089, %v1003, 0
        %v1124 = vsel %vm1089, %v1004, 0
        %v1127 = vsel %vm1089, %v1005, 0
        %v1130 = vsel %vm1089, %v1006, 0
        %v1133 = vsel %vm1089, %v1007, 0
        %v1136 = vsel %vm1089, %v1008, 0
        %v1139 = vsel %vm1089, %v1025, 0
        %v1142 = vsel %vm1089, %v1026, 0
        %v1145 = vsel %vm1089, %v1027, 0
        %v1148 = vsel %vm1089, %v1028, 0
        %v1151 = vsel %vm1089, %v1029, 0
        %v1154 = vsel %vm1089, %v1030, 0
        %v1157 = vsel %vm1089, %v1031, 0
        %v1160 = vsel %vm1089, %v1032, 0
        %v1163 = vsel %vm1089, %v1033, 0
        %v1166 = vsel %vm1089, %v1034, 0
        %v1169 = vsel %vm1089, %v1035, 0
        %v1172 = vsel %vm1089, %v1036, 0
        %v1175 = vsel %vm1089, %v1037, 0
        %v1178 = vsel %vm1089, %v1038, 0
        %v1181 = vsel %vm1089, %v1039, 0
        %v1184 = vsel %vm1089, %v1040, 0
        %1186 = vmatprep.subr.mxu0 0.0
        %1187 = vmatpush1.xpose.msra.mxu0 %v1139
        %1188 = vmatprep.subr.mxu0 0.0
        %1189 = vmatpush1.xpose.msra.mxu0 %v1142
        %1190 = vmatprep.subr.mxu0 0.0
        %1191 = vmatpush1.xpose.msra.mxu0 %v1145
        %1192 = vmatprep.subr.mxu0 0.0
        %1193 = vmatpush1.xpose.msra.mxu0 %v1148
        %1194 = vmatprep.subr.mxu0 0.0
        %1195 = vmatpush1.xpose.msra.mxu0 %v1151
        %1196 = vmatprep.subr.mxu0 0.0
        %1197 = vmatpush1.xpose.msra.mxu0 %v1154
        %1198 = vmatprep.subr.mxu0 0.0
        %1199 = vmatpush1.xpose.msra.mxu0 %v1157
        %1200 = vmatprep.subr.mxu0 0.0
        %1201 = vmatpush1.xpose.msra.mxu0 %v1160
        %1202 = vmatprep.subr.mxu0 0.0
        %1203 = vmatpush1.xpose.msra.mxu0 %v1163
        %1204 = vmatprep.subr.mxu0 0.0
        %1205 = vmatpush1.xpose.msra.mxu0 %v1166
        %1206 = vmatprep.subr.mxu0 0.0
        %1207 = vmatpush1.xpose.msra.mxu0 %v1169
        %1208 = vmatprep.subr.mxu0 0.0
        %1209 = vmatpush1.xpose.msra.mxu0 %v1172
        %1210 = vmatprep.subr.mxu0 0.0
        %1211 = vmatpush1.xpose.msra.mxu0 %v1175
        %1212 = vmatprep.subr.mxu0 0.0
        %1213 = vmatpush1.xpose.msra.mxu0 %v1178
        %1214 = vmatprep.subr.mxu0 0.0
        %1215 = vmatpush1.xpose.msra.mxu0 %v1181
        %1216 = vmatprep.subr.mxu0 0.0
        %1217 = vmatpush1.xpose.msra.mxu0 %v1184
        %1218 = vmatprep.subr.mxu0 0.0
        %1219 = vmatpush1.xpose.msra.mxu0 0.0
        %1220 = vmatprep.subr.mxu0 0.0
        %1221 = vmatpush1.xpose.msra.mxu0 0.0
        %1222 = vmatprep.subr.mxu0 0.0
        %1223 = vmatpush1.xpose.msra.mxu0 0.0
        %1224 = vmatprep.subr.mxu0 0.0
        %1225 = vmatpush1.xpose.msra.mxu0 0.0
        %1226 = vmatprep.subr.mxu0 0.0
        %1227 = vmatpush1.xpose.msra.mxu0 0.0
        %1228 = vmatprep.subr.mxu0 0.0
        %1229 = vmatpush1.xpose.msra.mxu0 0.0
        %1230 = vmatprep.subr.mxu0 0.0
        %1231 = vmatpush1.xpose.msra.mxu0 0.0
        %1232 = vmatprep.subr.mxu0 0.0
        %1233 = vmatpush1.xpose.msra.mxu0 0.0
        %1234 = vmatprep.subr.mxu0 0.0
        %1235 = vmatpush1.xpose.msra.mxu0 0.0
        %1236 = vmatprep.subr.mxu0 0.0
        %1237 = vmatpush1.xpose.msra.mxu0 0.0
        %1238 = vmatprep.subr.mxu0 0.0
        %1239 = vmatpush1.xpose.msra.mxu0 0.0
        %1240 = vmatprep.subr.mxu0 0.0
        %1241 = vmatpush1.xpose.msra.mxu0 0.0
        %1242 = vmatprep.subr.mxu0 0.0
        %1243 = vmatpush1.xpose.msra.mxu0 0.0
        %1244 = vmatprep.subr.mxu0 0.0
        %1245 = vmatpush1.xpose.msra.mxu0 0.0
        %1246 = vmatprep.subr.mxu0 0.0
        %1247 = vmatpush1.xpose.msra.mxu0 0.0
        %1248 = vmatprep.subr.mxu0 0.0
        %1249 = vmatpush1.xpose.msra.mxu0 0.0
        %1250 = vmatprep.mubr.f32.mxu0 0.0
        %1251 = vmatmul.mubr.f32.gmra.mrb[0].mxu0 %v1091
        %v1252 = vpop.f32.mrb[0].mxu0
        %v1253 = vadd.f32 0.0, %v1252
        %v1254 = vpop.f32.mrb[0].mxu0
        %1255 = vmatprep.mubr.f32.mxu0 0.0
        %1256 = vmatmul.mubr.f32.gmra.mrb[0].mxu0 %v1094
        %v1257 = vpop.f32.mrb[0].mxu0
        %v1258 = vadd.f32 0.0, %v1257
        %v1259 = vpop.f32.mrb[0].mxu0
        %1260 = vmatprep.mubr.f32.mxu0 0.0
        %1261 = vmatmul.mubr.f32.gmra.mrb[0].mxu0 %v1097
        %v1262 = vpop.f32.mrb[0].mxu0
        %v1263 = vadd.f32 0.0, %v1262
        %v1264 = vpop.f32.mrb[0].mxu0
        %1265 = vmatprep.mubr.f32.mxu0 0.0
        %1266 = vmatmul.mubr.f32.gmra.mrb[0].mxu0 %v1100
        %v1267 = vpop.f32.mrb[0].mxu0
        %v1268 = vadd.f32 0.0, %v1267
        %v1269 = vpop.f32.mrb[0].mxu0
        %1270 = vmatprep.mubr.f32.mxu0 0.0
        %1271 = vmatmul.mubr.f32.gmra.mrb[0].mxu0 %v1103
        %v1272 = vpop.f32.mrb[0].mxu0
        %v1273 = vadd.f32 0.0, %v1272
        %v1274 = vpop.f32.mrb[0].mxu0
        %1275 = vmatprep.mubr.f32.mxu0 0.0
        %1276 = vmatmul.mubr.f32.gmra.mrb[0].mxu0 %v1106
        %v1277 = vpop.f32.mrb[0].mxu0
        %v1278 = vadd.f32 0.0, %v1277
        %v1279 = vpop.f32.mrb[0].mxu0
        %1280 = vmatprep.mubr.f32.mxu0 0.0
        %1281 = vmatmul.mubr.f32.gmra.mrb[0].mxu0 %v1109
        %v1282 = vpop.f32.mrb[0].mxu0
        %v1283 = vadd.f32 0.0, %v1282
        %v1284 = vpop.f32.mrb[0].mxu0
        %1285 = vmatprep.mubr.f32.mxu0 0.0
        %1286 = vmatmul.mubr.f32.gmra.mrb[0].mxu0 %v1112
        %v1287 = vpop.f32.mrb[0].mxu0
        %v1288 = vadd.f32 0.0, %v1287
        %v1289 = vpop.f32.mrb[0].mxu0
        %1290 = vmatprep.mubr.f32.mxu0 0.0
        %1291 = vmatmul.mubr.f32.gmra.mrb[0].mxu0 %v1115
        %v1292 = vpop.f32.mrb[0].mxu0
        %v1293 = vadd.f32 0.0, %v1292
        %v1294 = vpop.f32.mrb[0].mxu0
        %1295 = vmatprep.mubr.f32.mxu0 0.0
        %1296 = vmatmul.mubr.f32.gmra.mrb[0].mxu0 %v1118
        %v1297 = vpop.f32.mrb[0].mxu0
        %v1298 = vadd.f32 0.0, %v1297
        %v1299 = vpop.f32.mrb[0].mxu0
        %1300 = vmatprep.mubr.f32.mxu0 0.0
        %1301 = vmatmul.mubr.f32.gmra.mrb[0].mxu0 %v1121
        %v1302 = vpop.f32.mrb[0].mxu0
        %v1303 = vadd.f32 0.0, %v1302
        %v1304 = vpop.f32.mrb[0].mxu0
        %1305 = vmatprep.mubr.f32.mxu0 0.0
        %1306 = vmatmul.mubr.f32.gmra.mrb[0].mxu0 %v1124
        %v1307 = vpop.f32.mrb[0].mxu0
        %v1308 = vadd.f32 0.0, %v1307
        %v1309 = vpop.f32.mrb[0].mxu0
        %1310 = vmatprep.mubr.f32.mxu0 0.0
        %1311 = vmatmul.mubr.f32.gmra.mrb[0].mxu0 %v1127
        %v1312 = vpop.f32.mrb[0].mxu0
        %v1313 = vadd.f32 0.0, %v1312
        %v1314 = vpop.f32.mrb[0].mxu0
        %1315 = vmatprep.mubr.f32.mxu0 0.0
        %1316 = vmatmul.mubr.f32.gmra.mrb[0].mxu0 %v1130
        %v1317 = vpop.f32.mrb[0].mxu0
        %v1318 = vadd.f32 0.0, %v1317
        %v1319 = vpop.f32.mrb[0].mxu0
        %1320 = vmatprep.mubr.f32.mxu0 0.0
        %1321 = vmatmul.mubr.f32.gmra.mrb[0].mxu0 %v1133
        %v1322 = vpop.f32.mrb[0].mxu0
        %v1323 = vadd.f32 0.0, %v1322
        %v1324 = vpop.f32.mrb[0].mxu0
        %1325 = vmatprep.mubr.f32.mxu0 0.0
        %1326 = vmatmul.mubr.f32.gmra.mrb[0].mxu0 %v1136
        %v1327 = vpop.f32.mrb[0].mxu0
        %v1328 = vadd.f32 0.0, %v1327
        %v1329 = vpop.f32.mrb[0].mxu0
        %1330 = vdwg.mxu0
        %v1332 = vsel %vm1089, %v1009, 0
        %v1335 = vsel %vm1089, %v1010, 0
        %v1338 = vsel %vm1089, %v1011, 0
        %v1341 = vsel %vm1089, %v1012, 0
        %v1344 = vsel %vm1089, %v1013, 0
        %v1347 = vsel %vm1089, %v1014, 0
        %v1350 = vsel %vm1089, %v1015, 0
        %v1353 = vsel %vm1089, %v1016, 0
        %v1356 = vsel %vm1089, %v1017, 0
        %v1359 = vsel %vm1089, %v1018, 0
        %v1362 = vsel %vm1089, %v1019, 0
        %v1365 = vsel %vm1089, %v1020, 0
        %v1368 = vsel %vm1089, %v1021, 0
        %v1371 = vsel %vm1089, %v1022, 0
        %v1374 = vsel %vm1089, %v1023, 0
        %v1377 = vsel %vm1089, %v1024, 0
        %v1380 = vsel %vm1089, %v1041, 0
        %v1383 = vsel %vm1089, %v1042, 0
        %v1386 = vsel %vm1089, %v1043, 0
        %v1389 = vsel %vm1089, %v1044, 0
        %v1392 = vsel %vm1089, %v1045, 0
        %v1395 = vsel %vm1089, %v1046, 0
        %v1398 = vsel %vm1089, %v1047, 0
        %v1401 = vsel %vm1089, %v1048, 0
        %v1404 = vsel %vm1089, %v1049, 0
        %v1407 = vsel %vm1089, %v1050, 0
        %v1410 = vsel %vm1089, %v1051, 0
        %v1413 = vsel %vm1089, %v1052, 0
        %v1416 = vsel %vm1089, %v1053, 0
        %v1419 = vsel %vm1089, %v1054, 0
        %v1422 = vsel %vm1089, %v1055, 0
        %v1425 = vsel %vm1089, %v1056, 0
        %1427 = vmatprep.subr.mxu0 0.0
        %1428 = vmatpush1.xpose.msra.mxu0 %v1380
        %1429 = vmatprep.subr.mxu0 0.0
        %1430 = vmatpush1.xpose.msra.mxu0 %v1383
        %1431 = vmatprep.subr.mxu0 0.0
        %1432 = vmatpush1.xpose.msra.mxu0 %v1386
        %1433 = vmatprep.subr.mxu0 0.0
        %1434 = vmatpush1.xpose.msra.mxu0 %v1389
        %1435 = vmatprep.subr.mxu0 0.0
        %1436 = vmatpush1.xpose.msra.mxu0 %v1392
        %1437 = vmatprep.subr.mxu0 0.0
        %1438 = vmatpush1.xpose.msra.mxu0 %v1395
        %1439 = vmatprep.subr.mxu0 0.0
        %1440 = vmatpush1.xpose.msra.mxu0 %v1398
        %1441 = vmatprep.subr.mxu0 0.0
        %1442 = vmatpush1.xpose.msra.mxu0 %v1401
        %1443 = vmatprep.subr.mxu0 0.0
        %1444 = vmatpush1.xpose.msra.mxu0 %v1404
        %1445 = vmatprep.subr.mxu0 0.0
        %1446 = vmatpush1.xpose.msra.mxu0 %v1407
        %1447 = vmatprep.subr.mxu0 0.0
        %1448 = vmatpush1.xpose.msra.mxu0 %v1410
        %1449 = vmatprep.subr.mxu0 0.0
        %1450 = vmatpush1.xpose.msra.mxu0 %v1413
        %1451 = vmatprep.subr.mxu0 0.0
        %1452 = vmatpush1.xpose.msra.mxu0 %v1416
        %1453 = vmatprep.subr.mxu0 0.0
        %1454 = vmatpush1.xpose.msra.mxu0 %v1419
        %1455 = vmatprep.subr.mxu0 0.0
        %1456 = vmatpush1.xpose.msra.mxu0 %v1422
        %1457 = vmatprep.subr.mxu0 0.0
        %1458 = vmatpush1.xpose.msra.mxu0 %v1425
        %1459 = vmatprep.subr.mxu0 0.0
        %1460 = vmatpush1.xpose.msra.mxu0 0.0
        %1461 = vmatprep.subr.mxu0 0.0
        %1462 = vmatpush1.xpose.msra.mxu0 0.0
        %1463 = vmatprep.subr.mxu0 0.0
        %1464 = vmatpush1.xpose.msra.mxu0 0.0
        %1465 = vmatprep.subr.mxu0 0.0
        %1466 = vmatpush1.xpose.msra.mxu0 0.0
        %1467 = vmatprep.subr.mxu0 0.0
        %1468 = vmatpush1.xpose.msra.mxu0 0.0
        %1469 = vmatprep.subr.mxu0 0.0
        %1470 = vmatpush1.xpose.msra.mxu0 0.0
        %1471 = vmatprep.subr.mxu0 0.0
        %1472 = vmatpush1.xpose.msra.mxu0 0.0
        %1473 = vmatprep.subr.mxu0 0.0
        %1474 = vmatpush1.xpose.msra.mxu0 0.0
        %1475 = vmatprep.subr.mxu0 0.0
        %1476 = vmatpush1.xpose.msra.mxu0 0.0
        %1477 = vmatprep.subr.mxu0 0.0
        %1478 = vmatpush1.xpose.msra.mxu0 0.0
        %1479 = vmatprep.subr.mxu0 0.0
        %1480 = vmatpush1.xpose.msra.mxu0 0.0
        %1481 = vmatprep.subr.mxu0 0.0
        %1482 = vmatpush1.xpose.msra.mxu0 0.0
        %1483 = vmatprep.subr.mxu0 0.0
        %1484 = vmatpush1.xpose.msra.mxu0 0.0
        %1485 = vmatprep.subr.mxu0 0.0
        %1486 = vmatpush1.xpose.msra.mxu0 0.0
        %1487 = vmatprep.subr.mxu0 0.0
        %1488 = vmatpush1.xpose.msra.mxu0 0.0
        %1489 = vmatprep.subr.mxu0 0.0
        %1490 = vmatpush1.xpose.msra.mxu0 0.0
        %1491 = vmatprep.mubr.f32.mxu0 0.0
        %1492 = vmatmul.mubr.f32.gmra.mrb[0].mxu0 %v1332
        %v1493 = vpop.f32.mrb[0].mxu0
        %v1494 = vadd.f32 0.0, %v1493
        %v1495 = vpop.f32.mrb[0].mxu0
        %1496 = vmatprep.mubr.f32.mxu0 0.0
        %1497 = vmatmul.mubr.f32.gmra.mrb[0].mxu0 %v1335
        %v1498 = vpop.f32.mrb[0].mxu0
        %v1499 = vadd.f32 0.0, %v1498
        %v1500 = vpop.f32.mrb[0].mxu0
        %1501 = vmatprep.mubr.f32.mxu0 0.0
        %1502 = vmatmul.mubr.f32.gmra.mrb[0].mxu0 %v1338
        %v1503 = vpop.f32.mrb[0].mxu0
        %v1504 = vadd.f32 0.0, %v1503
        %v1505 = vpop.f32.mrb[0].mxu0
        %1506 = vmatprep.mubr.f32.mxu0 0.0
        %1507 = vmatmul.mubr.f32.gmra.mrb[0].mxu0 %v1341
        %v1508 = vpop.f32.mrb[0].mxu0
        %v1509 = vadd.f32 0.0, %v1508
        %v1510 = vpop.f32.mrb[0].mxu0
        %1511 = vmatprep.mubr.f32.mxu0 0.0
        %1512 = vmatmul.mubr.f32.gmra.mrb[0].mxu0 %v1344
        %v1513 = vpop.f32.mrb[0].mxu0
        %v1514 = vadd.f32 0.0, %v1513
        %v1515 = vpop.f32.mrb[0].mxu0
        %1516 = vmatprep.mubr.f32.mxu0 0.0
        %1517 = vmatmul.mubr.f32.gmra.mrb[0].mxu0 %v1347
        %v1518 = vpop.f32.mrb[0].mxu0
        %v1519 = vadd.f32 0.0, %v1518
        %v1520 = vpop.f32.mrb[0].mxu0
        %1521 = vmatprep.mubr.f32.mxu0 0.0
        %1522 = vmatmul.mubr.f32.gmra.mrb[0].mxu0 %v1350
        %v1523 = vpop.f32.mrb[0].mxu0
        %v1524 = vadd.f32 0.0, %v1523
        %v1525 = vpop.f32.mrb[0].mxu0
        %1526 = vmatprep.mubr.f32.mxu0 0.0
        %1527 = vmatmul.mubr.f32.gmra.mrb[0].mxu0 %v1353
        %v1528 = vpop.f32.mrb[0].mxu0
        %v1529 = vadd.f32 0.0, %v1528
        %v1530 = vpop.f32.mrb[0].mxu0
        %1531 = vmatprep.mubr.f32.mxu0 0.0
        %1532 = vmatmul.mubr.f32.gmra.mrb[0].mxu0 %v1356
        %v1533 = vpop.f32.mrb[0].mxu0
        %v1534 = vadd.f32 0.0, %v1533
        %v1535 = vpop.f32.mrb[0].mxu0
        %1536 = vmatprep.mubr.f32.mxu0 0.0
        %1537 = vmatmul.mubr.f32.gmra.mrb[0].mxu0 %v1359
        %v1538 = vpop.f32.mrb[0].mxu0
        %v1539 = vadd.f32 0.0, %v1538
        %v1540 = vpop.f32.mrb[0].mxu0
        %1541 = vmatprep.mubr.f32.mxu0 0.0
        %1542 = vmatmul.mubr.f32.gmra.mrb[0].mxu0 %v1362
        %v1543 = vpop.f32.mrb[0].mxu0
        %v1544 = vadd.f32 0.0, %v1543
        %v1545 = vpop.f32.mrb[0].mxu0
        %1546 = vmatprep.mubr.f32.mxu0 0.0
        %1547 = vmatmul.mubr.f32.gmra.mrb[0].mxu0 %v1365
        %v1548 = vpop.f32.mrb[0].mxu0
        %v1549 = vadd.f32 0.0, %v1548
        %v1550 = vpop.f32.mrb[0].mxu0
        %1551 = vmatprep.mubr.f32.mxu0 0.0
        %1552 = vmatmul.mubr.f32.gmra.mrb[0].mxu0 %v1368
        %v1553 = vpop.f32.mrb[0].mxu0
        %v1554 = vadd.f32 0.0, %v1553
        %v1555 = vpop.f32.mrb[0].mxu0
        %1556 = vmatprep.mubr.f32.mxu0 0.0
        %1557 = vmatmul.mubr.f32.gmra.mrb[0].mxu0 %v1371
        %v1558 = vpop.f32.mrb[0].mxu0
        %v1559 = vadd.f32 0.0, %v1558
        %v1560 = vpop.f32.mrb[0].mxu0
        %1561 = vmatprep.mubr.f32.mxu0 0.0
        %1562 = vmatmul.mubr.f32.gmra.mrb[0].mxu0 %v1374
        %v1563 = vpop.f32.mrb[0].mxu0
        %v1564 = vadd.f32 0.0, %v1563
        %v1565 = vpop.f32.mrb[0].mxu0
        %1566 = vmatprep.mubr.f32.mxu0 0.0
        %1567 = vmatmul.mubr.f32.gmra.mrb[0].mxu0 %v1377
        %v1568 = vpop.f32.mrb[0].mxu0
        %v1569 = vadd.f32 0.0, %v1568
        %v1570 = vpop.f32.mrb[0].mxu0
        %1571 = vdwg.mxu0
        %v1572 = vld [vmem:[%s779] sm:$0xff]
        %v1573 = vld [vmem:[%s779 + $0x8] sm:$0xff]
        %v1574 = vld [vmem:[%s779 + $0x10] sm:$0xff]
        %v1575 = vld [vmem:[%s779 + $0x18] sm:$0xff]
        %v1576 = vld [vmem:[%s779 + $0x20] sm:$0xff]
        %v1577 = vld [vmem:[%s779 + $0x28] sm:$0xff]
        %v1578 = vld [vmem:[%s779 + $0x30] sm:$0xff]
        %v1579 = vld [vmem:[%s779 + $0x38] sm:$0xff]
        %v1580 = vld [vmem:[%s779 + $0x40] sm:$0xff]
        %v1581 = vld [vmem:[%s779 + $0x48] sm:$0xff]
        %v1582 = vld [vmem:[%s779 + $0x50] sm:$0xff]
        %v1583 = vld [vmem:[%s779 + $0x58] sm:$0xff]
        %v1584 = vld [vmem:[%s779 + $0x60] sm:$0xff]
        %v1585 = vld [vmem:[%s779 + $0x68] sm:$0xff]
        %v1586 = vld [vmem:[%s779 + $0x70] sm:$0xff]
        %v1587 = vld [vmem:[%s779 + $0x78] sm:$0xff]
        %v1588 = vld [vmem:[%s779 + $0x80] sm:$0xff]
        %v1589 = vld [vmem:[%s779 + $0x88] sm:$0xff]
        %v1590 = vld [vmem:[%s779 + $0x90] sm:$0xff]
        %v1591 = vld [vmem:[%s779 + $0x98] sm:$0xff]
        %v1592 = vld [vmem:[%s779 + $0xa0] sm:$0xff]
        %v1593 = vld [vmem:[%s779 + $0xa8] sm:$0xff]
        %v1594 = vld [vmem:[%s779 + $0xb0] sm:$0xff]
        %v1595 = vld [vmem:[%s779 + $0xb8] sm:$0xff]
        %v1596 = vld [vmem:[%s779 + $0xc0] sm:$0xff]
        %v1597 = vld [vmem:[%s779 + $0xc8] sm:$0xff]
        %v1598 = vld [vmem:[%s779 + $0xd0] sm:$0xff]
        %v1599 = vld [vmem:[%s779 + $0xd8] sm:$0xff]
        %v1600 = vld [vmem:[%s779 + $0xe0] sm:$0xff]
        %v1601 = vld [vmem:[%s779 + $0xe8] sm:$0xff]
        %v1602 = vld [vmem:[%s779 + $0xf0] sm:$0xff]
        %v1603 = vld [vmem:[%s779 + $0xf8] sm:$0xff]
        %vm1604 = vcmp.ne.s32.totalorder %v1572, 0
        %vm1605 = vcmp.ne.s32.totalorder %v1573, 0
        %vm1606 = vcmp.ne.s32.totalorder %v1574, 0
        %vm1607 = vcmp.ne.s32.totalorder %v1575, 0
        %vm1608 = vcmp.ne.s32.totalorder %v1576, 0
        %vm1609 = vcmp.ne.s32.totalorder %v1577, 0
        %vm1610 = vcmp.ne.s32.totalorder %v1578, 0
        %vm1611 = vcmp.ne.s32.totalorder %v1579, 0
        %vm1612 = vcmp.ne.s32.totalorder %v1580, 0
        %vm1613 = vcmp.ne.s32.totalorder %v1581, 0
        %vm1614 = vcmp.ne.s32.totalorder %v1582, 0
        %vm1615 = vcmp.ne.s32.totalorder %v1583, 0
        %vm1616 = vcmp.ne.s32.totalorder %v1584, 0
        %vm1617 = vcmp.ne.s32.totalorder %v1585, 0
        %vm1618 = vcmp.ne.s32.totalorder %v1586, 0
        %vm1619 = vcmp.ne.s32.totalorder %v1587, 0
        %vm1620 = vcmp.ne.s32.totalorder %v1588, 0
        %vm1621 = vcmp.ne.s32.totalorder %v1589, 0
        %vm1622 = vcmp.ne.s32.totalorder %v1590, 0
        %vm1623 = vcmp.ne.s32.totalorder %v1591, 0
        %vm1624 = vcmp.ne.s32.totalorder %v1592, 0
        %vm1625 = vcmp.ne.s32.totalorder %v1593, 0
        %vm1626 = vcmp.ne.s32.totalorder %v1594, 0
        %vm1627 = vcmp.ne.s32.totalorder %v1595, 0
        %vm1628 = vcmp.ne.s32.totalorder %v1596, 0
        %vm1629 = vcmp.ne.s32.totalorder %v1597, 0
        %vm1630 = vcmp.ne.s32.totalorder %v1598, 0
        %vm1631 = vcmp.ne.s32.totalorder %v1599, 0
        %vm1632 = vcmp.ne.s32.totalorder %v1600, 0
        %vm1633 = vcmp.ne.s32.totalorder %v1601, 0
        %vm1634 = vcmp.ne.s32.totalorder %v1602, 0
        %vm1635 = vcmp.ne.s32.totalorder %v1603, 0
        %v1636 = vsel %vm1604, -1e+30, %v1253
        %v1637 = vsel %vm1605, -1e+30, %v1258
        %v1638 = vsel %vm1606, -1e+30, %v1263
        %v1639 = vsel %vm1607, -1e+30, %v1268
        %v1640 = vsel %vm1608, -1e+30, %v1273
        %v1641 = vsel %vm1609, -1e+30, %v1278
        %v1642 = vsel %vm1610, -1e+30, %v1283
        %v1643 = vsel %vm1611, -1e+30, %v1288
        %v1644 = vsel %vm1612, -1e+30, %v1293
        %v1645 = vsel %vm1613, -1e+30, %v1298
        %v1646 = vsel %vm1614, -1e+30, %v1303
        %v1647 = vsel %vm1615, -1e+30, %v1308
        %v1648 = vsel %vm1616, -1e+30, %v1313
        %v1649 = vsel %vm1617, -1e+30, %v1318
        %v1650 = vsel %vm1618, -1e+30, %v1323
        %v1651 = vsel %vm1619, -1e+30, %v1328
        %v1652 = vsel %vm1620, -1e+30, %v1494
        %v1653 = vsel %vm1621, -1e+30, %v1499
        %v1654 = vsel %vm1622, -1e+30, %v1504
        %v1655 = vsel %vm1623, -1e+30, %v1509
        %v1656 = vsel %vm1624, -1e+30, %v1514
        %v1657 = vsel %vm1625, -1e+30, %v1519
        %v1658 = vsel %vm1626, -1e+30, %v1524
        %v1659 = vsel %vm1627, -1e+30, %v1529
        %v1660 = vsel %vm1628, -1e+30, %v1534
        %v1661 = vsel %vm1629, -1e+30, %v1539
        %v1662 = vsel %vm1630, -1e+30, %v1544
        %v1663 = vsel %vm1631, -1e+30, %v1549
        %v1664 = vsel %vm1632, -1e+30, %v1554
        %v1665 = vsel %vm1633, -1e+30, %v1559
        %v1666 = vsel %vm1634, -1e+30, %v1564
        %v1667 = vsel %vm1635, -1e+30, %v1569
        %v1668 = vmax.f32 %v1636, %v1638
        %v1669 = vmax.f32 %v1637, %v1639
        %v1670 = vmax.f32 %v1668, %v1640
        %v1671 = vmax.f32 %v1669, %v1641
        %v1672 = vmax.f32 %v1670, %v1642
        %v1673 = vmax.f32 %v1671, %v1643
        %v1674 = vmax.f32 %v1672, %v1644
        %v1675 = vmax.f32 %v1673, %v1645
        %v1676 = vmax.f32 %v1674, %v1646
        %v1677 = vmax.f32 %v1675, %v1647
        %v1678 = vmax.f32 %v1676, %v1648
        %v1679 = vmax.f32 %v1677, %v1649
        %v1680 = vmax.f32 %v1678, %v1650
        %v1681 = vmax.f32 %v1679, %v1651
        %v1682 = vmax.f32 %v1680, %v1681
        %v1683 = vrot.slane %v1682, 4
        %v1684 = vmax.f32 %v1682, %v1683
        %v1685 = vrot.slane %v1684, 2
        %v1686 = vmax.f32 %v1684, %v1685
        %v1687 = vrot.slane %v1686, 1
        %v1688 = vmax.f32 %v1686, %v1687
        %v1689 = vmax.f32 %v1652, %v1654
        %v1690 = vmax.f32 %v1653, %v1655
        %v1691 = vmax.f32 %v1689, %v1656
        %v1692 = vmax.f32 %v1690, %v1657
        %v1693 = vmax.f32 %v1691, %v1658
        %v1694 = vmax.f32 %v1692, %v1659
        %v1695 = vmax.f32 %v1693, %v1660
        %v1696 = vmax.f32 %v1694, %v1661
        %v1697 = vmax.f32 %v1695, %v1662
        %v1698 = vmax.f32 %v1696, %v1663
        %v1699 = vmax.f32 %v1697, %v1664
        %v1700 = vmax.f32 %v1698, %v1665
        %v1701 = vmax.f32 %v1699, %v1666
        %v1702 = vmax.f32 %v1700, %v1667
        %v1703 = vmax.f32 %v1701, %v1702
        %v1704 = vrot.slane %v1703, 4
        %v1705 = vmax.f32 %v1703, %v1704
        %v1706 = vrot.slane %v1705, 2
        %v1707 = vmax.f32 %v1705, %v1706
        %v1708 = vrot.slane %v1707, 1
        %v1709 = vmax.f32 %v1707, %v1708
        %v1710 = vsub.f32 %v1636, %v1688
        %v1711 = vsub.f32 %v1637, %v1688
        %v1712 = vsub.f32 %v1638, %v1688
        %v1713 = vsub.f32 %v1639, %v1688
        %v1714 = vsub.f32 %v1640, %v1688
        %v1715 = vsub.f32 %v1641, %v1688
        %v1716 = vsub.f32 %v1642, %v1688
        %v1717 = vsub.f32 %v1643, %v1688
        %v1718 = vsub.f32 %v1644, %v1688
        %v1719 = vsub.f32 %v1645, %v1688
        %v1720 = vsub.f32 %v1646, %v1688
        %v1721 = vsub.f32 %v1647, %v1688
        %v1722 = vsub.f32 %v1648, %v1688
        %v1723 = vsub.f32 %v1649, %v1688
        %v1724 = vsub.f32 %v1650, %v1688
        %v1725 = vsub.f32 %v1651, %v1688
        %v1726 = vsub.f32 %v1652, %v1709
        %v1727 = vsub.f32 %v1653, %v1709
        %v1728 = vsub.f32 %v1654, %v1709
        %v1729 = vsub.f32 %v1655, %v1709
        %v1730 = vsub.f32 %v1656, %v1709
        %v1731 = vsub.f32 %v1657, %v1709
        %v1732 = vsub.f32 %v1658, %v1709
        %v1733 = vsub.f32 %v1659, %v1709
        %v1734 = vsub.f32 %v1660, %v1709
        %v1735 = vsub.f32 %v1661, %v1709
        %v1736 = vsub.f32 %v1662, %v1709
        %v1737 = vsub.f32 %v1663, %v1709
        %v1738 = vsub.f32 %v1664, %v1709
        %v1739 = vsub.f32 %v1665, %v1709
        %v1740 = vsub.f32 %v1666, %v1709
        %v1741 = vsub.f32 %v1667, %v1709
        %v1742 = vmul.f32 %v1710, 1.442695
        %v1743 = vpow.pop %v1742
        %v1744 = vmul.f32 %v1711, 1.442695
        %v1745 = vpow.pop %v1744
        %v1746 = vmul.f32 %v1712, 1.442695
        %v1747 = vpow.pop %v1746
        %v1748 = vmul.f32 %v1713, 1.442695
        %v1749 = vpow.pop %v1748
        %v1750 = vmul.f32 %v1714, 1.442695
        %v1751 = vpow.pop %v1750
        %v1752 = vmul.f32 %v1715, 1.442695
        %v1753 = vpow.pop %v1752
        %v1754 = vmul.f32 %v1716, 1.442695
        %v1755 = vpow.pop %v1754
        %v1756 = vmul.f32 %v1717, 1.442695
        %v1757 = vpow.pop %v1756
        %v1758 = vmul.f32 %v1718, 1.442695
        %v1759 = vpow.pop %v1758
        %v1760 = vmul.f32 %v1719, 1.442695
        %v1761 = vpow.pop %v1760
        %v1762 = vmul.f32 %v1720, 1.442695
        %v1763 = vpow.pop %v1762
        %v1764 = vmul.f32 %v1721, 1.442695
        %v1765 = vpow.pop %v1764
        %v1766 = vmul.f32 %v1722, 1.442695
        %v1767 = vpow.pop %v1766
        %v1768 = vmul.f32 %v1723, 1.442695
        %v1769 = vpow.pop %v1768
        %v1770 = vmul.f32 %v1724, 1.442695
        %v1771 = vpow.pop %v1770
        %v1772 = vmul.f32 %v1725, 1.442695
        %v1773 = vpow.pop %v1772
        %v1774 = vmul.f32 %v1726, 1.442695
        %v1775 = vpow.pop %v1774
        %v1776 = vmul.f32 %v1727, 1.442695
        %v1777 = vpow.pop %v1776
        %v1778 = vmul.f32 %v1728, 1.442695
        %v1779 = vpow.pop %v1778
        %v1780 = vmul.f32 %v1729, 1.442695
        %v1781 = vpow.pop %v1780
        %v1782 = vmul.f32 %v1730, 1.442695
        %v1783 = vpow.pop %v1782
        %v1784 = vmul.f32 %v1731, 1.442695
        %v1785 = vpow.pop %v1784
        %v1786 = vmul.f32 %v1732, 1.442695
        %v1787 = vpow.pop %v1786
        %v1788 = vmul.f32 %v1733, 1.442695
        %v1789 = vpow.pop %v1788
        %v1790 = vmul.f32 %v1734, 1.442695
        %v1791 = vpow.pop %v1790
        %v1792 = vmul.f32 %v1735, 1.442695
        %v1793 = vpow.pop %v1792
        %v1794 = vmul.f32 %v1736, 1.442695
        %v1795 = vpow.pop %v1794
        %v1796 = vmul.f32 %v1737, 1.442695
        %v1797 = vpow.pop %v1796
        %v1798 = vmul.f32 %v1738, 1.442695
        %v1799 = vpow.pop %v1798
        %v1800 = vmul.f32 %v1739, 1.442695
        %v1801 = vpow.pop %v1800
        %v1802 = vmul.f32 %v1740, 1.442695
        %v1803 = vpow.pop %v1802
        %v1804 = vmul.f32 %v1741, 1.442695
        %v1805 = vpow.pop %v1804
        %v1806 = vadd.f32 %v1743, %v1745
        %v1807 = vadd.f32 %v1806, %v1747
        %v1808 = vadd.f32 %v1807, %v1749
        %v1809 = vadd.f32 %v1808, %v1751
        %v1810 = vadd.f32 %v1809, %v1753
        %v1811 = vadd.f32 %v1810, %v1755
        %v1812 = vadd.f32 %v1811, %v1757
        %v1813 = vadd.f32 %v1812, %v1759
        %v1814 = vadd.f32 %v1813, %v1761
        %v1815 = vadd.f32 %v1814, %v1763
        %v1816 = vadd.f32 %v1815, %v1765
        %v1817 = vadd.f32 %v1816, %v1767
        %v1818 = vadd.f32 %v1817, %v1769
        %v1819 = vadd.f32 %v1818, %v1771
        %v1820 = vadd.f32 %v1819, %v1773
        %v1821 = vrot.slane %v1820, 4
        %v1822 = vadd.f32 %v1820, %v1821
        %v1823 = vrot.slane %v1822, 2
        %v1824 = vadd.f32 %v1822, %v1823
        %v1825 = vrot.slane %v1824, 1
        %v1826 = vadd.f32 %v1824, %v1825
        %v1827 = vadd.f32 %v1775, %v1777
        %v1828 = vadd.f32 %v1827, %v1779
        %v1829 = vadd.f32 %v1828, %v1781
        %v1830 = vadd.f32 %v1829, %v1783
        %v1831 = vadd.f32 %v1830, %v1785
        %v1832 = vadd.f32 %v1831, %v1787
        %v1833 = vadd.f32 %v1832, %v1789
        %v1834 = vadd.f32 %v1833, %v1791
        %v1835 = vadd.f32 %v1834, %v1793
        %v1836 = vadd.f32 %v1835, %v1795
        %v1837 = vadd.f32 %v1836, %v1797
        %v1838 = vadd.f32 %v1837, %v1799
        %v1839 = vadd.f32 %v1838, %v1801
        %v1840 = vadd.f32 %v1839, %v1803
        %v1841 = vadd.f32 %v1840, %v1805
        %v1842 = vrot.slane %v1841, 4
        %v1843 = vadd.f32 %v1841, %v1842
        %v1844 = vrot.slane %v1843, 2
        %v1845 = vadd.f32 %v1843, %v1844
        %v1846 = vrot.slane %v1845, 1
        %v1847 = vadd.f32 %v1845, %v1846
        %v1848 = vrcp.pop %v1826
        %v1849 = vmul.f32 1.0, %v1848
        %v1850 = vrcp.pop %v1847
        %v1851 = vmul.f32 1.0, %v1850
        %v1852 = vmul.f32 %v1743, %v1849
        %v1853 = vmul.f32 %v1745, %v1849
        %v1854 = vmul.f32 %v1747, %v1849
        %v1855 = vmul.f32 %v1749, %v1849
        %v1856 = vmul.f32 %v1751, %v1849
        %v1857 = vmul.f32 %v1753, %v1849
        %v1858 = vmul.f32 %v1755, %v1849
        %v1859 = vmul.f32 %v1757, %v1849
        %v1860 = vmul.f32 %v1759, %v1849
        %v1861 = vmul.f32 %v1761, %v1849
        %v1862 = vmul.f32 %v1763, %v1849
        %v1863 = vmul.f32 %v1765, %v1849
        %v1864 = vmul.f32 %v1767, %v1849
        %v1865 = vmul.f32 %v1769, %v1849
        %v1866 = vmul.f32 %v1771, %v1849
        %v1867 = vmul.f32 %v1773, %v1849
        %v1868 = vmul.f32 %v1775, %v1851
        %v1869 = vmul.f32 %v1777, %v1851
        %v1870 = vmul.f32 %v1779, %v1851
        %v1871 = vmul.f32 %v1781, %v1851
        %v1872 = vmul.f32 %v1783, %v1851
        %v1873 = vmul.f32 %v1785, %v1851
        %v1874 = vmul.f32 %v1787, %v1851
        %v1875 = vmul.f32 %v1789, %v1851
        %v1876 = vmul.f32 %v1791, %v1851
        %v1877 = vmul.f32 %v1793, %v1851
        %v1878 = vmul.f32 %v1795, %v1851
        %v1879 = vmul.f32 %v1797, %v1851
        %v1880 = vmul.f32 %v1799, %v1851
        %v1881 = vmul.f32 %v1801, %v1851
        %v1882 = vmul.f32 %v1803, %v1851
        %v1883 = vmul.f32 %v1805, %v1851
        %1884 = vst [vmem:[%s831] sm:$0xff] %v1852
        %1885 = vst [vmem:[%s831 + $0x8] sm:$0xff] %v1853
        %1886 = vst [vmem:[%s831 + $0x10] sm:$0xff] %v1854
        %1887 = vst [vmem:[%s831 + $0x18] sm:$0xff] %v1855
        %1888 = vst [vmem:[%s831 + $0x20] sm:$0xff] %v1856
        %1889 = vst [vmem:[%s831 + $0x28] sm:$0xff] %v1857
        %1890 = vst [vmem:[%s831 + $0x30] sm:$0xff] %v1858
        %1891 = vst [vmem:[%s831 + $0x38] sm:$0xff] %v1859
        %1892 = vst [vmem:[%s831 + $0x40] sm:$0xff] %v1860
        %1893 = vst [vmem:[%s831 + $0x48] sm:$0xff] %v1861
        %1894 = vst [vmem:[%s831 + $0x50] sm:$0xff] %v1862
        %1895 = vst [vmem:[%s831 + $0x58] sm:$0xff] %v1863
        %1896 = vst [vmem:[%s831 + $0x60] sm:$0xff] %v1864
        %1897 = vst [vmem:[%s831 + $0x68] sm:$0xff] %v1865
        %1898 = vst [vmem:[%s831 + $0x70] sm:$0xff] %v1866
        %1899 = vst [vmem:[%s831 + $0x78] sm:$0xff] %v1867
        %1900 = vst [vmem:[%s831 + $0x80] sm:$0xff] %v1868
        %1901 = vst [vmem:[%s831 + $0x88] sm:$0xff] %v1869
        %1902 = vst [vmem:[%s831 + $0x90] sm:$0xff] %v1870
        %1903 = vst [vmem:[%s831 + $0x98] sm:$0xff] %v1871
        %1904 = vst [vmem:[%s831 + $0xa0] sm:$0xff] %v1872
        %1905 = vst [vmem:[%s831 + $0xa8] sm:$0xff] %v1873
        %1906 = vst [vmem:[%s831 + $0xb0] sm:$0xff] %v1874
        %1907 = vst [vmem:[%s831 + $0xb8] sm:$0xff] %v1875
        %1908 = vst [vmem:[%s831 + $0xc0] sm:$0xff] %v1876
        %1909 = vst [vmem:[%s831 + $0xc8] sm:$0xff] %v1877
        %1910 = vst [vmem:[%s831 + $0xd0] sm:$0xff] %v1878
        %1911 = vst [vmem:[%s831 + $0xd8] sm:$0xff] %v1879
        %1912 = vst [vmem:[%s831 + $0xe0] sm:$0xff] %v1880
        %1913 = vst [vmem:[%s831 + $0xe8] sm:$0xff] %v1881
        %1914 = vst [vmem:[%s831 + $0xf0] sm:$0xff] %v1882
        %1915 = vst [vmem:[%s831 + $0xf8] sm:$0xff] %v1883
        %v1916 = vld [vmem:[#allocation2] sm:$0xff]
        %v1917 = vld [vmem:[#allocation2 + $0x8] sm:$0xff]
        %v1918 = vld [vmem:[#allocation2 + $0x10] sm:$0xff]
        %v1919 = vld [vmem:[#allocation2 + $0x18] sm:$0xff]
        %v1920 = vld [vmem:[#allocation2 + $0x20] sm:$0xff]
        %v1921 = vld [vmem:[#allocation2 + $0x28] sm:$0xff]
        %v1922 = vld [vmem:[#allocation2 + $0x30] sm:$0xff]
        %v1923 = vld [vmem:[#allocation2 + $0x38] sm:$0xff]
        %v1924 = vld [vmem:[#allocation2 + $0x40] sm:$0xff]
        %v1925 = vld [vmem:[#allocation2 + $0x48] sm:$0xff]
        %v1926 = vld [vmem:[#allocation2 + $0x50] sm:$0xff]
        %v1927 = vld [vmem:[#allocation2 + $0x58] sm:$0xff]
        %v1928 = vld [vmem:[#allocation2 + $0x60] sm:$0xff]
        %v1929 = vld [vmem:[#allocation2 + $0x68] sm:$0xff]
        %v1930 = vld [vmem:[#allocation2 + $0x70] sm:$0xff]
        %v1931 = vld [vmem:[#allocation2 + $0x78] sm:$0xff]
        %v1932 = vld [vmem:[#allocation2 + $0x80] sm:$0xff]
        %v1933 = vld [vmem:[#allocation2 + $0x88] sm:$0xff]
        %v1934 = vld [vmem:[#allocation2 + $0x90] sm:$0xff]
        %v1935 = vld [vmem:[#allocation2 + $0x98] sm:$0xff]
        %v1936 = vld [vmem:[#allocation2 + $0xa0] sm:$0xff]
        %v1937 = vld [vmem:[#allocation2 + $0xa8] sm:$0xff]
        %v1938 = vld [vmem:[#allocation2 + $0xb0] sm:$0xff]
        %v1939 = vld [vmem:[#allocation2 + $0xb8] sm:$0xff]
        %v1940 = vld [vmem:[#allocation2 + $0xc0] sm:$0xff]
        %v1941 = vld [vmem:[#allocation2 + $0xc8] sm:$0xff]
        %v1942 = vld [vmem:[#allocation2 + $0xd0] sm:$0xff]
        %v1943 = vld [vmem:[#allocation2 + $0xd8] sm:$0xff]
        %v1944 = vld [vmem:[#allocation2 + $0xe0] sm:$0xff]
        %v1945 = vld [vmem:[#allocation2 + $0xe8] sm:$0xff]
        %v1946 = vld [vmem:[#allocation2 + $0xf0] sm:$0xff]
        %v1947 = vld [vmem:[#allocation2 + $0xf8] sm:$0xff]
        %1948 = vmatprep.subr.mxu0 0.0
        %1949 = vmatpush1.msra.mxu0 %v1057
        %1950 = vmatprep.subr.mxu0 0.0
        %1951 = vmatpush1.msra.mxu0 %v1058
        %1952 = vmatprep.subr.mxu0 0.0
        %1953 = vmatpush1.msra.mxu0 %v1059
        %1954 = vmatprep.subr.mxu0 0.0
        %1955 = vmatpush1.msra.mxu0 %v1060
        %1956 = vmatprep.subr.mxu0 0.0
        %1957 = vmatpush1.msra.mxu0 %v1061
        %1958 = vmatprep.subr.mxu0 0.0
        %1959 = vmatpush1.msra.mxu0 %v1062
        %1960 = vmatprep.subr.mxu0 0.0
        %1961 = vmatpush1.msra.mxu0 %v1063
        %1962 = vmatprep.subr.mxu0 0.0
        %1963 = vmatpush1.msra.mxu0 %v1064
        %1964 = vmatprep.subr.mxu0 0.0
        %1965 = vmatpush1.msra.mxu0 %v1065
        %1966 = vmatprep.subr.mxu0 0.0
        %1967 = vmatpush1.msra.mxu0 %v1066
        %1968 = vmatprep.subr.mxu0 0.0
        %1969 = vmatpush1.msra.mxu0 %v1067
        %1970 = vmatprep.subr.mxu0 0.0
        %1971 = vmatpush1.msra.mxu0 %v1068
        %1972 = vmatprep.subr.mxu0 0.0
        %1973 = vmatpush1.msra.mxu0 %v1069
        %1974 = vmatprep.subr.mxu0 0.0
        %1975 = vmatpush1.msra.mxu0 %v1070
        %1976 = vmatprep.subr.mxu0 0.0
        %1977 = vmatpush1.msra.mxu0 %v1071
        %1978 = vmatprep.subr.mxu0 0.0
        %1979 = vmatpush1.msra.mxu0 %v1072
        %1980 = vmatprep.subr.mxu0 0.0
        %1981 = vmatpush1.msra.mxu0 0.0
        %1982 = vmatprep.subr.mxu0 0.0
        %1983 = vmatpush1.msra.mxu0 0.0
        %1984 = vmatprep.subr.mxu0 0.0
        %1985 = vmatpush1.msra.mxu0 0.0
        %1986 = vmatprep.subr.mxu0 0.0
        %1987 = vmatpush1.msra.mxu0 0.0
        %1988 = vmatprep.subr.mxu0 0.0
        %1989 = vmatpush1.msra.mxu0 0.0
        %1990 = vmatprep.subr.mxu0 0.0
        %1991 = vmatpush1.msra.mxu0 0.0
        %1992 = vmatprep.subr.mxu0 0.0
        %1993 = vmatpush1.msra.mxu0 0.0
        %1994 = vmatprep.subr.mxu0 0.0
        %1995 = vmatpush1.msra.mxu0 0.0
        %1996 = vmatprep.subr.mxu0 0.0
        %1997 = vmatpush1.msra.mxu0 0.0
        %1998 = vmatprep.subr.mxu0 0.0
        %1999 = vmatpush1.msra.mxu0 0.0
        %2000 = vmatprep.subr.mxu0 0.0
        %2001 = vmatpush1.msra.mxu0 0.0
        %2002 = vmatprep.subr.mxu0 0.0
        %2003 = vmatpush1.msra.mxu0 0.0
        %2004 = vmatprep.subr.mxu0 0.0
        %2005 = vmatpush1.msra.mxu0 0.0
        %2006 = vmatprep.subr.mxu0 0.0
        %2007 = vmatpush1.msra.mxu0 0.0
        %2008 = vmatprep.subr.mxu0 0.0
        %2009 = vmatpush1.msra.mxu0 0.0
        %2010 = vmatprep.subr.mxu0 0.0
        %2011 = vmatpush1.msra.mxu0 0.0
        %2012 = vmatprep.mubr.f32.mxu0 0.0
        %2013 = vmatmul.mubr.f32.gmra.mrb[0].mxu0 %v1852
        %v2014 = vpop.f32.mrb[0].mxu0
        %v2015 = vadd.f32 0.0, %v2014
        %v2016 = vpop.f32.mrb[0].mxu0
        %2017 = vmatprep.mubr.f32.mxu0 0.0
        %2018 = vmatmul.mubr.f32.gmra.mrb[0].mxu0 %v1853
        %v2019 = vpop.f32.mrb[0].mxu0
        %v2020 = vadd.f32 0.0, %v2019
        %v2021 = vpop.f32.mrb[0].mxu0
        %2022 = vmatprep.mubr.f32.mxu0 0.0
        %2023 = vmatmul.mubr.f32.gmra.mrb[0].mxu0 %v1854
        %v2024 = vpop.f32.mrb[0].mxu0
        %v2025 = vadd.f32 0.0, %v2024
        %v2026 = vpop.f32.mrb[0].mxu0
        %2027 = vmatprep.mubr.f32.mxu0 0.0
        %2028 = vmatmul.mubr.f32.gmra.mrb[0].mxu0 %v1855
        %v2029 = vpop.f32.mrb[0].mxu0
        %v2030 = vadd.f32 0.0, %v2029
        %v2031 = vpop.f32.mrb[0].mxu0
        %2032 = vmatprep.mubr.f32.mxu0 0.0
        %2033 = vmatmul.mubr.f32.gmra.mrb[0].mxu0 %v1856
        %v2034 = vpop.f32.mrb[0].mxu0
        %v2035 = vadd.f32 0.0, %v2034
        %v2036 = vpop.f32.mrb[0].mxu0
        %2037 = vmatprep.mubr.f32.mxu0 0.0
        %2038 = vmatmul.mubr.f32.gmra.mrb[0].mxu0 %v1857
        %v2039 = vpop.f32.mrb[0].mxu0
        %v2040 = vadd.f32 0.0, %v2039
        %v2041 = vpop.f32.mrb[0].mxu0
        %2042 = vmatprep.mubr.f32.mxu0 0.0
        %2043 = vmatmul.mubr.f32.gmra.mrb[0].mxu0 %v1858
        %v2044 = vpop.f32.mrb[0].mxu0
        %v2045 = vadd.f32 0.0, %v2044
        %v2046 = vpop.f32.mrb[0].mxu0
        %2047 = vmatprep.mubr.f32.mxu0 0.0
        %2048 = vmatmul.mubr.f32.gmra.mrb[0].mxu0 %v1859
        %v2049 = vpop.f32.mrb[0].mxu0
        %v2050 = vadd.f32 0.0, %v2049
        %v2051 = vpop.f32.mrb[0].mxu0
        %2052 = vmatprep.mubr.f32.mxu0 0.0
        %2053 = vmatmul.mubr.f32.gmra.mrb[0].mxu0 %v1860
        %v2054 = vpop.f32.mrb[0].mxu0
        %v2055 = vadd.f32 0.0, %v2054
        %v2056 = vpop.f32.mrb[0].mxu0
        %2057 = vmatprep.mubr.f32.mxu0 0.0
        %2058 = vmatmul.mubr.f32.gmra.mrb[0].mxu0 %v1861
        %v2059 = vpop.f32.mrb[0].mxu0
        %v2060 = vadd.f32 0.0, %v2059
        %v2061 = vpop.f32.mrb[0].mxu0
        %2062 = vmatprep.mubr.f32.mxu0 0.0
        %2063 = vmatmul.mubr.f32.gmra.mrb[0].mxu0 %v1862
        %v2064 = vpop.f32.mrb[0].mxu0
        %v2065 = vadd.f32 0.0, %v2064
        %v2066 = vpop.f32.mrb[0].mxu0
        %2067 = vmatprep.mubr.f32.mxu0 0.0
        %2068 = vmatmul.mubr.f32.gmra.mrb[0].mxu0 %v1863
        %v2069 = vpop.f32.mrb[0].mxu0
        %v2070 = vadd.f32 0.0, %v2069
        %v2071 = vpop.f32.mrb[0].mxu0
        %2072 = vmatprep.mubr.f32.mxu0 0.0
        %2073 = vmatmul.mubr.f32.gmra.mrb[0].mxu0 %v1864
        %v2074 = vpop.f32.mrb[0].mxu0
        %v2075 = vadd.f32 0.0, %v2074
        %v2076 = vpop.f32.mrb[0].mxu0
        %2077 = vmatprep.mubr.f32.mxu0 0.0
        %2078 = vmatmul.mubr.f32.gmra.mrb[0].mxu0 %v1865
        %v2079 = vpop.f32.mrb[0].mxu0
        %v2080 = vadd.f32 0.0, %v2079
        %v2081 = vpop.f32.mrb[0].mxu0
        %2082 = vmatprep.mubr.f32.mxu0 0.0
        %2083 = vmatmul.mubr.f32.gmra.mrb[0].mxu0 %v1866
        %v2084 = vpop.f32.mrb[0].mxu0
        %v2085 = vadd.f32 0.0, %v2084
        %v2086 = vpop.f32.mrb[0].mxu0
        %2087 = vmatprep.mubr.f32.mxu0 0.0
        %2088 = vmatmul.mubr.f32.gmra.mrb[0].mxu0 %v1867
        %v2089 = vpop.f32.mrb[0].mxu0
        %v2090 = vadd.f32 0.0, %v2089
        %v2091 = vpop.f32.mrb[0].mxu0
        %2092 = vdwg.mxu0
        %2093 = vmatprep.subr.mxu0 0.0
        %2094 = vmatpush1.msra.mxu0 %v1073
        %2095 = vmatprep.subr.mxu0 0.0
        %2096 = vmatpush1.msra.mxu0 %v1074
        %2097 = vmatprep.subr.mxu0 0.0
        %2098 = vmatpush1.msra.mxu0 %v1075
        %2099 = vmatprep.subr.mxu0 0.0
        %2100 = vmatpush1.msra.mxu0 %v1076
        %2101 = vmatprep.subr.mxu0 0.0
        %2102 = vmatpush1.msra.mxu0 %v1077
        %2103 = vmatprep.subr.mxu0 0.0
        %2104 = vmatpush1.msra.mxu0 %v1078
        %2105 = vmatprep.subr.mxu0 0.0
        %2106 = vmatpush1.msra.mxu0 %v1079
        %2107 = vmatprep.subr.mxu0 0.0
        %2108 = vmatpush1.msra.mxu0 %v1080
        %2109 = vmatprep.subr.mxu0 0.0
        %2110 = vmatpush1.msra.mxu0 %v1081
        %2111 = vmatprep.subr.mxu0 0.0
        %2112 = vmatpush1.msra.mxu0 %v1082
        %2113 = vmatprep.subr.mxu0 0.0
        %2114 = vmatpush1.msra.mxu0 %v1083
        %2115 = vmatprep.subr.mxu0 0.0
        %2116 = vmatpush1.msra.mxu0 %v1084
        %2117 = vmatprep.subr.mxu0 0.0
        %2118 = vmatpush1.msra.mxu0 %v1085
        %2119 = vmatprep.subr.mxu0 0.0
        %2120 = vmatpush1.msra.mxu0 %v1086
        %2121 = vmatprep.subr.mxu0 0.0
        %2122 = vmatpush1.msra.mxu0 %v1087
        %2123 = vmatprep.subr.mxu0 0.0
        %2124 = vmatpush1.msra.mxu0 %v1088
        %2125 = vmatprep.subr.mxu0 0.0
        %2126 = vmatpush1.msra.mxu0 0.0
        %2127 = vmatprep.subr.mxu0 0.0
        %2128 = vmatpush1.msra.mxu0 0.0
        %2129 = vmatprep.subr.mxu0 0.0
        %2130 = vmatpush1.msra.mxu0 0.0
        %2131 = vmatprep.subr.mxu0 0.0
        %2132 = vmatpush1.msra.mxu0 0.0
        %2133 = vmatprep.subr.mxu0 0.0
        %2134 = vmatpush1.msra.mxu0 0.0
        %2135 = vmatprep.subr.mxu0 0.0
        %2136 = vmatpush1.msra.mxu0 0.0
        %2137 = vmatprep.subr.mxu0 0.0
        %2138 = vmatpush1.msra.mxu0 0.0
        %2139 = vmatprep.subr.mxu0 0.0
        %2140 = vmatpush1.msra.mxu0 0.0
        %2141 = vmatprep.subr.mxu0 0.0
        %2142 = vmatpush1.msra.mxu0 0.0
        %2143 = vmatprep.subr.mxu0 0.0
        %2144 = vmatpush1.msra.mxu0 0.0
        %2145 = vmatprep.subr.mxu0 0.0
        %2146 = vmatpush1.msra.mxu0 0.0
        %2147 = vmatprep.subr.mxu0 0.0
        %2148 = vmatpush1.msra.mxu0 0.0
        %2149 = vmatprep.subr.mxu0 0.0
        %2150 = vmatpush1.msra.mxu0 0.0
        %2151 = vmatprep.subr.mxu0 0.0
        %2152 = vmatpush1.msra.mxu0 0.0
        %2153 = vmatprep.subr.mxu0 0.0
        %2154 = vmatpush1.msra.mxu0 0.0
        %2155 = vmatprep.subr.mxu0 0.0
        %2156 = vmatpush1.msra.mxu0 0.0
        %2157 = vmatprep.mubr.f32.mxu0 0.0
        %2158 = vmatmul.mubr.f32.gmra.mrb[0].mxu0 %v1868
        %v2159 = vpop.f32.mrb[0].mxu0
        %v2160 = vadd.f32 0.0, %v2159
        %v2161 = vpop.f32.mrb[0].mxu0
        %2162 = vmatprep.mubr.f32.mxu0 0.0
        %2163 = vmatmul.mubr.f32.gmra.mrb[0].mxu0 %v1869
        %v2164 = vpop.f32.mrb[0].mxu0
        %v2165 = vadd.f32 0.0, %v2164
        %v2166 = vpop.f32.mrb[0].mxu0
        %2167 = vmatprep.mubr.f32.mxu0 0.0
        %2168 = vmatmul.mubr.f32.gmra.mrb[0].mxu0 %v1870
        %v2169 = vpop.f32.mrb[0].mxu0
        %v2170 = vadd.f32 0.0, %v2169
        %v2171 = vpop.f32.mrb[0].mxu0
        %2172 = vmatprep.mubr.f32.mxu0 0.0
        %2173 = vmatmul.mubr.f32.gmra.mrb[0].mxu0 %v1871
        %v2174 = vpop.f32.mrb[0].mxu0
        %v2175 = vadd.f32 0.0, %v2174
        %v2176 = vpop.f32.mrb[0].mxu0
        %2177 = vmatprep.mubr.f32.mxu0 0.0
        %2178 = vmatmul.mubr.f32.gmra.mrb[0].mxu0 %v1872
        %v2179 = vpop.f32.mrb[0].mxu0
        %v2180 = vadd.f32 0.0, %v2179
        %v2181 = vpop.f32.mrb[0].mxu0
        %2182 = vmatprep.mubr.f32.mxu0 0.0
        %2183 = vmatmul.mubr.f32.gmra.mrb[0].mxu0 %v1873
        %v2184 = vpop.f32.mrb[0].mxu0
        %v2185 = vadd.f32 0.0, %v2184
        %v2186 = vpop.f32.mrb[0].mxu0
        %2187 = vmatprep.mubr.f32.mxu0 0.0
        %2188 = vmatmul.mubr.f32.gmra.mrb[0].mxu0 %v1874
        %v2189 = vpop.f32.mrb[0].mxu0
        %v2190 = vadd.f32 0.0, %v2189
        %v2191 = vpop.f32.mrb[0].mxu0
        %2192 = vmatprep.mubr.f32.mxu0 0.0
        %2193 = vmatmul.mubr.f32.gmra.mrb[0].mxu0 %v1875
        %v2194 = vpop.f32.mrb[0].mxu0
        %v2195 = vadd.f32 0.0, %v2194
        %v2196 = vpop.f32.mrb[0].mxu0
        %2197 = vmatprep.mubr.f32.mxu0 0.0
        %2198 = vmatmul.mubr.f32.gmra.mrb[0].mxu0 %v1876
        %v2199 = vpop.f32.mrb[0].mxu0
        %v2200 = vadd.f32 0.0, %v2199
        %v2201 = vpop.f32.mrb[0].mxu0
        %2202 = vmatprep.mubr.f32.mxu0 0.0
        %2203 = vmatmul.mubr.f32.gmra.mrb[0].mxu0 %v1877
        %v2204 = vpop.f32.mrb[0].mxu0
        %v2205 = vadd.f32 0.0, %v2204
        %v2206 = vpop.f32.mrb[0].mxu0
        %2207 = vmatprep.mubr.f32.mxu0 0.0
        %2208 = vmatmul.mubr.f32.gmra.mrb[0].mxu0 %v1878
        %v2209 = vpop.f32.mrb[0].mxu0
        %v2210 = vadd.f32 0.0, %v2209
        %v2211 = vpop.f32.mrb[0].mxu0
        %2212 = vmatprep.mubr.f32.mxu0 0.0
        %2213 = vmatmul.mubr.f32.gmra.mrb[0].mxu0 %v1879
        %v2214 = vpop.f32.mrb[0].mxu0
        %v2215 = vadd.f32 0.0, %v2214
        %v2216 = vpop.f32.mrb[0].mxu0
        %2217 = vmatprep.mubr.f32.mxu0 0.0
        %2218 = vmatmul.mubr.f32.gmra.mrb[0].mxu0 %v1880
        %v2219 = vpop.f32.mrb[0].mxu0
        %v2220 = vadd.f32 0.0, %v2219
        %v2221 = vpop.f32.mrb[0].mxu0
        %2222 = vmatprep.mubr.f32.mxu0 0.0
        %2223 = vmatmul.mubr.f32.gmra.mrb[0].mxu0 %v1881
        %v2224 = vpop.f32.mrb[0].mxu0
        %v2225 = vadd.f32 0.0, %v2224
        %v2226 = vpop.f32.mrb[0].mxu0
        %2227 = vmatprep.mubr.f32.mxu0 0.0
        %2228 = vmatmul.mubr.f32.gmra.mrb[0].mxu0 %v1882
        %v2229 = vpop.f32.mrb[0].mxu0
        %v2230 = vadd.f32 0.0, %v2229
        %v2231 = vpop.f32.mrb[0].mxu0
        %2232 = vmatprep.mubr.f32.mxu0 0.0
        %2233 = vmatmul.mubr.f32.gmra.mrb[0].mxu0 %v1883
        %v2234 = vpop.f32.mrb[0].mxu0
        %v2235 = vadd.f32 0.0, %v2234
        %v2236 = vpop.f32.mrb[0].mxu0
        %2237 = vdwg.mxu0
        %v2238 = vadd.f32 %v1916, %v2015
        %v2239 = vadd.f32 %v1917, %v2020
        %v2240 = vadd.f32 %v1918, %v2025
        %v2241 = vadd.f32 %v1919, %v2030
        %v2242 = vadd.f32 %v1920, %v2035
        %v2243 = vadd.f32 %v1921, %v2040
        %v2244 = vadd.f32 %v1922, %v2045
        %v2245 = vadd.f32 %v1923, %v2050
        %v2246 = vadd.f32 %v1924, %v2055
        %v2247 = vadd.f32 %v1925, %v2060
        %v2248 = vadd.f32 %v1926, %v2065
        %v2249 = vadd.f32 %v1927, %v2070
        %v2250 = vadd.f32 %v1928, %v2075
        %v2251 = vadd.f32 %v1929, %v2080
        %v2252 = vadd.f32 %v1930, %v2085
        %v2253 = vadd.f32 %v1931, %v2090
        %v2254 = vadd.f32 %v1932, %v2160
        %v2255 = vadd.f32 %v1933, %v2165
        %v2256 = vadd.f32 %v1934, %v2170
        %v2257 = vadd.f32 %v1935, %v2175
        %v2258 = vadd.f32 %v1936, %v2180
        %v2259 = vadd.f32 %v1937, %v2185
        %v2260 = vadd.f32 %v1938, %v2190
        %v2261 = vadd.f32 %v1939, %v2195
        %v2262 = vadd.f32 %v1940, %v2200
        %v2263 = vadd.f32 %v1941, %v2205
        %v2264 = vadd.f32 %v1942, %v2210
        %v2265 = vadd.f32 %v1943, %v2215
        %v2266 = vadd.f32 %v1944, %v2220
        %v2267 = vadd.f32 %v1945, %v2225
        %v2268 = vadd.f32 %v1946, %v2230
        %v2269 = vadd.f32 %v1947, %v2235
        %2270 = vst.msk [vmem:[#allocation2] sm:$0xff] %vm1089, %v2238
        %2271 = vst.msk [vmem:[#allocation2 + $0x8] sm:$0xff] %vm1089, %v2239
        %2272 = vst.msk [vmem:[#allocation2 + $0x10] sm:$0xff] %vm1089, %v2240
        %2273 = vst.msk [vmem:[#allocation2 + $0x18] sm:$0xff] %vm1089, %v2241
        %2274 = vst.msk [vmem:[#allocation2 + $0x20] sm:$0xff] %vm1089, %v2242
        %2275 = vst.msk [vmem:[#allocation2 + $0x28] sm:$0xff] %vm1089, %v2243
        %2276 = vst.msk [vmem:[#allocation2 + $0x30] sm:$0xff] %vm1089, %v2244
        %2277 = vst.msk [vmem:[#allocation2 + $0x38] sm:$0xff] %vm1089, %v2245
        %2278 = vst.msk [vmem:[#allocation2 + $0x40] sm:$0xff] %vm1089, %v2246
        %2279 = vst.msk [vmem:[#allocation2 + $0x48] sm:$0xff] %vm1089, %v2247
        %2280 = vst.msk [vmem:[#allocation2 + $0x50] sm:$0xff] %vm1089, %v2248
        %2281 = vst.msk [vmem:[#allocation2 + $0x58] sm:$0xff] %vm1089, %v2249
        %2282 = vst.msk [vmem:[#allocation2 + $0x60] sm:$0xff] %vm1089, %v2250
        %2283 = vst.msk [vmem:[#allocation2 + $0x68] sm:$0xff] %vm1089, %v2251
        %2284 = vst.msk [vmem:[#allocation2 + $0x70] sm:$0xff] %vm1089, %v2252
        %2285 = vst.msk [vmem:[#allocation2 + $0x78] sm:$0xff] %vm1089, %v2253
        %2286 = vst.msk [vmem:[#allocation2 + $0x80] sm:$0xff] %vm1089, %v2254
        %2287 = vst.msk [vmem:[#allocation2 + $0x88] sm:$0xff] %vm1089, %v2255
        %2288 = vst.msk [vmem:[#allocation2 + $0x90] sm:$0xff] %vm1089, %v2256
        %2289 = vst.msk [vmem:[#allocation2 + $0x98] sm:$0xff] %vm1089, %v2257
        %2290 = vst.msk [vmem:[#allocation2 + $0xa0] sm:$0xff] %vm1089, %v2258
        %2291 = vst.msk [vmem:[#allocation2 + $0xa8] sm:$0xff] %vm1089, %v2259
        %2292 = vst.msk [vmem:[#allocation2 + $0xb0] sm:$0xff] %vm1089, %v2260
        %2293 = vst.msk [vmem:[#allocation2 + $0xb8] sm:$0xff] %vm1089, %v2261
        %2294 = vst.msk [vmem:[#allocation2 + $0xc0] sm:$0xff] %vm1089, %v2262
        %2295 = vst.msk [vmem:[#allocation2 + $0xc8] sm:$0xff] %vm1089, %v2263
        %2296 = vst.msk [vmem:[#allocation2 + $0xd0] sm:$0xff] %vm1089, %v2264
        %2297 = vst.msk [vmem:[#allocation2 + $0xd8] sm:$0xff] %vm1089, %v2265
        %2298 = vst.msk [vmem:[#allocation2 + $0xe0] sm:$0xff] %vm1089, %v2266
        %2299 = vst.msk [vmem:[#allocation2 + $0xe8] sm:$0xff] %vm1089, %v2267
        %2300 = vst.msk [vmem:[#allocation2 + $0xf0] sm:$0xff] %vm1089, %v2268
        %2301 = vst.msk [vmem:[#allocation2 + $0xf8] sm:$0xff] %vm1089, %v2269
        %v2302 = vld [vmem:[#allocation2] sm:$0xff]
        %v2303 = vld [vmem:[#allocation2 + $0x8] sm:$0xff]
        %v2304 = vld [vmem:[#allocation2 + $0x10] sm:$0xff]
        %v2305 = vld [vmem:[#allocation2 + $0x18] sm:$0xff]
        %v2306 = vld [vmem:[#allocation2 + $0x20] sm:$0xff]
        %v2307 = vld [vmem:[#allocation2 + $0x28] sm:$0xff]
        %v2308 = vld [vmem:[#allocation2 + $0x30] sm:$0xff]
        %v2309 = vld [vmem:[#allocation2 + $0x38] sm:$0xff]
        %v2310 = vld [vmem:[#allocation2 + $0x40] sm:$0xff]
        %v2311 = vld [vmem:[#allocation2 + $0x48] sm:$0xff]
        %v2312 = vld [vmem:[#allocation2 + $0x50] sm:$0xff]
        %v2313 = vld [vmem:[#allocation2 + $0x58] sm:$0xff]
        %v2314 = vld [vmem:[#allocation2 + $0x60] sm:$0xff]
        %v2315 = vld [vmem:[#allocation2 + $0x68] sm:$0xff]
        %v2316 = vld [vmem:[#allocation2 + $0x70] sm:$0xff]
        %v2317 = vld [vmem:[#allocation2 + $0x78] sm:$0xff]
        %v2318 = vld [vmem:[#allocation2 + $0x80] sm:$0xff]
        %v2319 = vld [vmem:[#allocation2 + $0x88] sm:$0xff]
        %v2320 = vld [vmem:[#allocation2 + $0x90] sm:$0xff]
        %v2321 = vld [vmem:[#allocation2 + $0x98] sm:$0xff]
        %v2322 = vld [vmem:[#allocation2 + $0xa0] sm:$0xff]
        %v2323 = vld [vmem:[#allocation2 + $0xa8] sm:$0xff]
        %v2324 = vld [vmem:[#allocation2 + $0xb0] sm:$0xff]
        %v2325 = vld [vmem:[#allocation2 + $0xb8] sm:$0xff]
        %v2326 = vld [vmem:[#allocation2 + $0xc0] sm:$0xff]
        %v2327 = vld [vmem:[#allocation2 + $0xc8] sm:$0xff]
        %v2328 = vld [vmem:[#allocation2 + $0xd0] sm:$0xff]
        %v2329 = vld [vmem:[#allocation2 + $0xd8] sm:$0xff]
        %v2330 = vld [vmem:[#allocation2 + $0xe0] sm:$0xff]
        %v2331 = vld [vmem:[#allocation2 + $0xe8] sm:$0xff]
        %v2332 = vld [vmem:[#allocation2 + $0xf0] sm:$0xff]
        %v2333 = vld [vmem:[#allocation2 + $0xf8] sm:$0xff]
        %2334 = vst.msk [vmem:[%s857] sm:$0xff] %vm1089, %v2302
        %2335 = vst.msk [vmem:[%s857 + $0x8] sm:$0xff] %vm1089, %v2303
        %2336 = vst.msk [vmem:[%s857 + $0x10] sm:$0xff] %vm1089, %v2304
        %2337 = vst.msk [vmem:[%s857 + $0x18] sm:$0xff] %vm1089, %v2305
        %2338 = vst.msk [vmem:[%s857 + $0x20] sm:$0xff] %vm1089, %v2306
        %2339 = vst.msk [vmem:[%s857 + $0x28] sm:$0xff] %vm1089, %v2307
        %2340 = vst.msk [vmem:[%s857 + $0x30] sm:$0xff] %vm1089, %v2308
        %2341 = vst.msk [vmem:[%s857 + $0x38] sm:$0xff] %vm1089, %v2309
        %2342 = vst.msk [vmem:[%s857 + $0x40] sm:$0xff] %vm1089, %v2310
        %2343 = vst.msk [vmem:[%s857 + $0x48] sm:$0xff] %vm1089, %v2311
        %2344 = vst.msk [vmem:[%s857 + $0x50] sm:$0xff] %vm1089, %v2312
        %2345 = vst.msk [vmem:[%s857 + $0x58] sm:$0xff] %vm1089, %v2313
        %2346 = vst.msk [vmem:[%s857 + $0x60] sm:$0xff] %vm1089, %v2314
        %2347 = vst.msk [vmem:[%s857 + $0x68] sm:$0xff] %vm1089, %v2315
        %2348 = vst.msk [vmem:[%s857 + $0x70] sm:$0xff] %vm1089, %v2316
        %2349 = vst.msk [vmem:[%s857 + $0x78] sm:$0xff] %vm1089, %v2317
        %2350 = vst.msk [vmem:[%s857 + $0x80] sm:$0xff] %vm1089, %v2318
        %2351 = vst.msk [vmem:[%s857 + $0x88] sm:$0xff] %vm1089, %v2319
        %2352 = vst.msk [vmem:[%s857 + $0x90] sm:$0xff] %vm1089, %v2320
        %2353 = vst.msk [vmem:[%s857 + $0x98] sm:$0xff] %vm1089, %v2321
        %2354 = vst.msk [vmem:[%s857 + $0xa0] sm:$0xff] %vm1089, %v2322
        %2355 = vst.msk [vmem:[%s857 + $0xa8] sm:$0xff] %vm1089, %v2323
        %2356 = vst.msk [vmem:[%s857 + $0xb0] sm:$0xff] %vm1089, %v2324
        %2357 = vst.msk [vmem:[%s857 + $0xb8] sm:$0xff] %vm1089, %v2325
        %2358 = vst.msk [vmem:[%s857 + $0xc0] sm:$0xff] %vm1089, %v2326
        %2359 = vst.msk [vmem:[%s857 + $0xc8] sm:$0xff] %vm1089, %v2327
        %2360 = vst.msk [vmem:[%s857 + $0xd0] sm:$0xff] %vm1089, %v2328
        %2361 = vst.msk [vmem:[%s857 + $0xd8] sm:$0xff] %vm1089, %v2329
        %2362 = vst.msk [vmem:[%s857 + $0xe0] sm:$0xff] %vm1089, %v2330
        %2363 = vst.msk [vmem:[%s857 + $0xe8] sm:$0xff] %vm1089, %v2331
        %2364 = vst.msk [vmem:[%s857 + $0xf0] sm:$0xff] %vm1089, %v2332
        %2365 = vst.msk [vmem:[%s857 + $0xf8] sm:$0xff] %vm1089, %v2333
        %s2366 = smul.u32 2, %s26
        %p2367 = scmp.lt.s32.totalorder %s25, 1
        %s2368 = scalar_select %p2367, %s25, 1
        %p2369 = scmp.lt.s32.totalorder %s2366, 1
        %s2370 = scalar_select %p2369, %s2366, 1
        %s2371 = smul.addr %s2370, 16
        %s2372 = smul.addr %s2368, 32
        %s2373 = sadd.s32 %s2371, %s2372
        %s2374 = smul.addr %s2373, 8
        %s2375 = scalar_lea.vmem %s4, %s2374
        %s2376 = sand.u32 %s197, 1
        %s2377 = scalar_lea.sflag [#allocation8], %s2376
        %s2378 = sand.u32 %s197, 1
        %s2379 = smul.addr %s2378, 256
        %s2380 = scalar_lea.vmem [#allocation7], %s2379
        // Predicated region
        $region155: #{tpu_custom_call.1} parent=137 // pred_check
          %p2381 = pneg %p177
        $region156: #{tpu_custom_call.1} parent=137 // pred_check_branch
          %2383 = sbr.rel (%p2381) target = $region158
        $region157: #{tpu_custom_call.1} parent=137 // pred_region
          %s2384 = smul.u32 2, %s26
        $region158: #{tpu_custom_call.1} parent=137 // pred_fallthru
          _
        // Predicated region
        $region159: #{tpu_custom_call.1} parent=137 // pred_check
          %p2385 = pneg %p207
        $region160: #{tpu_custom_call.1} parent=137 // pred_check_branch
          %2387 = sbr.rel (%p2385) target = $region162
        $region161: #{tpu_custom_call.1} parent=137 // pred_region
          %s2388 = smul.u32 2, %s26
          %s2390 = ssub.s32 4096, 4096
          %2391 = vsyncadd %s2377, %s2390
          %s2392 = smul.addr %s2388, 32
          %s2393 = sadd.s32 %s27, %s2392
          %s2394 = smul.addr %s25, 64
          %s2395 = sadd.s32 %s2393, %s2394
          %s2396 = smul.addr %s2395, 128
          %s2397 = scalar_lea.hbm %s5, %s2396
          %s2398 = sshll.u32 %s2380, 4
          %s2399 = int_to_ptr.vmem [resolvable:$true] %s2398
          %2404 = dma.vmem_to_hbm [thread:$0]  %s2399, 4096, %s2397, %s2377, 128, 256, 8
        $region162: #{tpu_custom_call.1} parent=137 // pred_fallthru
          _
      $region138: #{tpu_custom_call.1} parent=5 // pred_fallthru
        _
      %p2405 = scmp.le.s32.totalorder 2, %s15
      // Predicated region
      $region163: #{tpu_custom_call.1} parent=5 // pred_check
        %p2406 = pneg %p2405
      $region164: #{tpu_custom_call.1} parent=5 // pred_check_branch
        %2408 = sbr.rel (%p2406) target = $region166
      $region165: #{tpu_custom_call.1} parent=5 // pred_region
        %s2409 = ssub.s32 %s15, 2
        // Predicated region
        $region167: #{tpu_custom_call.1} parent=165 // pred_check
          %p2410 = pneg %p183
        $region168: #{tpu_custom_call.1} parent=165 // pred_check_branch
          %2412 = sbr.rel (%p2410) target = $region170
        $region169: #{tpu_custom_call.1} parent=165 // pred_region
          %s2413 = smul.u32 2, %s29
          %p2414 = scmp.lt.s32.totalorder %s28, 1
          %s2415 = scalar_select %p2414, %s28, 1
          %p2416 = scmp.lt.s32.totalorder %s2413, 1
          %s2417 = scalar_select %p2416, %s2413, 1
          %s2418 = smul.addr %s2417, 16
          %s2419 = smul.addr %s2415, 32
          %s2420 = sadd.s32 %s2418, %s2419
          %s2421 = smul.addr %s2420, 8
          %s2422 = scalar_lea.vmem %s4, %s2421
        $region170: #{tpu_custom_call.1} parent=165 // pred_fallthru
          _
        // Predicated region
        $region171: #{tpu_custom_call.1} parent=165 // pred_check
          %p2423 = pneg %p213
        $region172: #{tpu_custom_call.1} parent=165 // pred_check_branch
          %2425 = sbr.rel (%p2423) target = $region174
        $region173: #{tpu_custom_call.1} parent=165 // pred_region
          %s2426 = sand.u32 %s198, 1
          %s2427 = scalar_lea.sflag [#allocation8], %s2426
          %s2428 = sand.u32 %s198, 1
          %s2429 = smul.addr %s2428, 256
          %s2430 = scalar_lea.vmem [#allocation7], %s2429
          %2431 = dma.done %s2427, 4096
        $region174: #{tpu_custom_call.1} parent=165 // pred_fallthru
          _
      $region166: #{tpu_custom_call.1} parent=5 // pred_fallthru
        _
    $region6: #{tpu_custom_call.1} parent=1 // loop_footer
      %s19 = sadd.s32 1, %s15
    $region7: #{tpu_custom_call.1} parent=1 // loop_footer_branch
      %14 = sbr.rel target = $region3
    $region8: #{tpu_custom_call.1} parent=1 // loop_exit
      _
    %2432 = vsyncpa [#allocation8], 1
    %s2433 = scalar_lea.sflag [#allocation8], 1
    %2434 = vsyncpa %s2433, 1

</llo_original>
